<compile_context>
chip_gen: v6e
topology: v6e:2x2x1
jax: 0.10.0
libtpu: 0.0.40
codegen_flags: <defaults>
</compile_context>

<pallas_src>
import functools

import jax
import jax.numpy as jnp
import numpy as np
from jax import lax
from jax.experimental import pallas as pl
from jax.experimental.pallas import tpu as pltpu


def _cosformer_attn_kernel(q_ref, k_ref, v_ref, scq_ref, sck_ref, o_ref,
                           kv_acc, ksum_acc, *, eps, compute_dtype, approx_recip):
    # q_ref:    (H, tL, d)   io dtype (bf16 default)
    # k_ref:    (H, tS, d)   io dtype
    # v_ref:    (H, tS, d)   io dtype
    # scq_ref:  (tL, 2)      f32, columns [sin, cos] for this query tile
    # sck_ref:  (tS, 2)      f32, columns [sin, cos] for this key tile
    # o_ref:    (H, tL, d)   io dtype
    # kv_acc:   (H, 2d, d)   f32 accumulator, persists across the S axis
    # ksum_acc: (H, 8, 2d)   f32 accumulator (denominator; 8 identical rows)
    s_idx = pl.program_id(2)
    n_s = pl.num_programs(2)
    H, tS, d = k_ref.shape

    @pl.when(s_idx == 0)
    def _init():
        kv_acc[...] = jnp.zeros_like(kv_acc)
        ksum_acc[...] = jnp.zeros_like(ksum_acc)

    # ---- feature map, hoisted: one f32 pass over the whole (H, tS, d) tile --------
    k_all = jnp.maximum(k_ref[...].astype(jnp.float32), 0.0)     # ReLU
    sin_k = sck_ref[:, 0:1]                                      # (tS, 1) -> bcast
    cos_k = sck_ref[:, 1:2]
    # fused sin/cos reweighting -> single 2d-wide feature dim per head
    k_aug = jnp.concatenate([k_all * sin_k, k_all * cos_k], axis=-1)   # (H, tS, 2d) f32
    # NOTE: zero-padded S rows (wrapper pads k/v with zeros) give ReLU(0) = 0, so
    # k_aug rows for padded positions are exactly zero and contribute nothing to
    # either accumulator -- no in-kernel masking required.

    # ---- denominator: ksum += sum_s k_aug, kept entirely in f32 -------------------
    ones_rows = jnp.ones((H, 8, tS), jnp.float32)
    ksum_acc[...] += lax.dot_general(
        ones_rows, k_aug,
        dimension_numbers=(((2,), (1,)), ((0,), (0,))),
        preferred_element_type=jnp.float32)                       # (H, 8, 2d)

    # ---- kv accumulation: one batched MXU contraction over all heads --------------
    kv_acc[...] += lax.dot_general(
        k_aug.astype(compute_dtype), v_ref[...].astype(compute_dtype),
        dimension_numbers=(((1,), (1,)), ((0,), (0,))),           # contract seq axis
        preferred_element_type=jnp.float32)                       # (H, 2d, d)

    # ---- finalize (once per (batch, L-tile)): numerator + f32 denominator ---------
    @pl.when(s_idx == n_s - 1)
    def _finalize():
        q_all = jnp.maximum(q_ref[...].astype(jnp.float32), 0.0)  # (H, tL, d)
        sin_q = scq_ref[:, 0:1]
        cos_q = scq_ref[:, 1:2]
        q_aug = jnp.concatenate([q_all * sin_q, q_all * cos_q], axis=-1)  # (H, tL, 2d)
        num = lax.dot_general(
            q_aug.astype(compute_dtype), kv_acc[...].astype(compute_dtype),
            dimension_numbers=(((2,), (1,)), ((0,), (0,))),
            preferred_element_type=jnp.float32)                   # (H, tL, d)
        ksum = ksum_acc[:, 0:1, :]                                # (H, 1, 2d) f32
        denom = jnp.sum(q_aug * ksum, axis=-1, keepdims=True)     # (H, tL, 1) f32
        denom = jnp.maximum(denom, eps)
        o_ref[...] = (num * pl.reciprocal(denom, approx=approx_recip)).astype(o_ref.dtype)


def _vmem_buf_bytes(rows, cols, itemsize):
    """Conservative padded VMEM footprint of one (rows, cols) buffer."""
    sub = 8 * max(1, 4 // itemsize)            # f32: 8 sublanes, bf16: 16
    r = ((rows + sub - 1) // sub) * sub
    c = ((cols + 127) // 128) * 128
    return r * c * itemsize


def cosformer_attention_core(q_h, k_h, v_h, sc_q, sc_k, *, num_heads, eps=1e-6,
                             s_block=1024, l_block=1024,
                             compute_dtype=jnp.bfloat16, approx_recip=True,
                             kv_buffers=None):
    """q_h: (N*H, L, d), k_h/v_h: (N*H, S, d), sc_q: (L, 2), sc_k: (S, 2) -> (N*H, L, d)."""
    NH, L, d = q_h.shape
    S = k_h.shape[1]
    H = num_heads
    assert NH % H == 0
    N = NH // H

    # Tile sizes: full extent when small, otherwise a multiple of 8 that we pad to.
    tL = L if L <= l_block else max(8, (l_block // 8) * 8)
    tS = S if S <= s_block else max(8, (s_block // 8) * 8)
    L_pad = pl.cdiv(L, tL) * tL
    S_pad = pl.cdiv(S, tS) * tS

    # Zero padding is exactly neutral: ReLU(0)=0 zeroes the augmented k rows, and
    # padded q rows produce 0/eps -> 0 outputs that are sliced off below.
    if L_pad != L:
        q_h = jnp.pad(q_h, ((0, 0), (0, L_pad - L), (0, 0)))
        sc_q = jnp.pad(sc_q, ((0, L_pad - L), (0, 0)))
    if S_pad != S:
        k_h = jnp.pad(k_h, ((0, 0), (0, S_pad - S), (0, 0)))
        v_h = jnp.pad(v_h, ((0, 0), (0, S_pad - S), (0, 0)))
        sc_k = jnp.pad(sc_k, ((0, S_pad - S), (0, 0)))
    n_l = L_pad // tL
    n_s = S_pad // tS

    # Real VMEM footprint (double-buffered operands + f32 accumulators + headroom).
    io_isize = jnp.dtype(q_h.dtype).itemsize
    q_blk = H * _vmem_buf_bytes(tL, d, io_isize)
    k_blk = H * _vmem_buf_bytes(tS, d, io_isize)
    sc_blk = _vmem_buf_bytes(tL, 2, 4) + _vmem_buf_bytes(tS, 2, 4)
    scratch = H * (_vmem_buf_bytes(2 * d, d, 4) + _vmem_buf_bytes(8, 2 * d, 4))
    need = 2 * (2 * q_blk + 2 * k_blk + sc_blk) + scratch + (4 << 20)
    # Defaults keep this well under v7x's 64 MiB physical VMEM; the 96 MiB ceiling
    # is only reachable with larger user tiles (fine on 128 MiB v5e/v6e).
    vmem_limit = int(min(max(need, 16 << 20), 96 << 20))

    kernel = functools.partial(
        _cosformer_attn_kernel, eps=eps, compute_dtype=compute_dtype,
        approx_recip=approx_recip)

    def kv_spec():
        if kv_buffers is not None:
            return pl.BlockSpec((H, tS, d), lambda b, l, s: (b, s, 0),
                                pipeline_mode=pl.Buffered(kv_buffers))
        return pl.BlockSpec((H, tS, d), lambda b, l, s: (b, s, 0))

    out = pl.pallas_call(
        kernel,
        out_shape=jax.ShapeDtypeStruct((NH, L_pad, d), q_h.dtype),
        grid_spec=pltpu.PrefetchScalarGridSpec(
            num_scalar_prefetch=0,
            grid=(N, n_l, n_s),
            in_specs=[
                pl.BlockSpec((H, tL, d), lambda b, l, s: (b, l, 0)),   # q (resident over s)
                kv_spec(),                                             # k tile
                kv_spec(),                                             # v tile
                pl.BlockSpec((tL, 2), lambda b, l, s: (l, 0)),         # [sin|cos] for q tile
                pl.BlockSpec((tS, 2), lambda b, l, s: (s, 0)),         # [sin|cos] for k tile
            ],
            out_specs=pl.BlockSpec((H, tL, d), lambda b, l, s: (b, l, 0)),
            scratch_shapes=[pltpu.VMEM((H, 2 * d, d), jnp.float32),
                            pltpu.VMEM((H, 8, 2 * d), jnp.float32)],
        ),
        compiler_params=pltpu.CompilerParams(
            dimension_semantics=("parallel", "parallel", "arbitrary"),
            vmem_limit_bytes=vmem_limit,
        ),
    )(q_h, k_h, v_h, sc_q, sc_k)

    return out[:, :L, :] if L_pad != L else out


class CosformerAttentionPallas:
    """JAX/Pallas reimplementation of the non-causal CosformerAttention forward."""

    def __init__(self, embed_dim, num_heads, key, has_outproj=True):
        assert embed_dim % num_heads == 0
        self.embed_dim = embed_dim
        self.num_heads = num_heads
        self.head_dim = embed_dim // num_heads
        self.has_outproj = has_outproj

        ks = jax.random.split(key, 8)
        scale = 1.0 / np.sqrt(embed_dim)
        # PyTorch nn.Linear: y = x @ W.T + b, W shape (out, in)
        self.Wq = jax.random.normal(ks[0], (embed_dim, embed_dim), jnp.float32) * scale
        self.bq = jax.random.normal(ks[1], (embed_dim,), jnp.float32) * scale
        self.Wk = jax.random.normal(ks[2], (embed_dim, embed_dim), jnp.float32) * scale
        self.bk = jax.random.normal(ks[3], (embed_dim,), jnp.float32) * scale
        self.Wv = jax.random.normal(ks[4], (embed_dim, embed_dim), jnp.float32) * scale
        self.bv = jax.random.normal(ks[5], (embed_dim,), jnp.float32) * scale
        self.Wo = jax.random.normal(ks[6], (embed_dim, embed_dim), jnp.float32) * scale
        self.bo = jax.random.normal(ks[7], (embed_dim,), jnp.float32) * scale

    def __call__(self, query, key=None, value=None, eps=1e-6,
                 io_dtype=jnp.bfloat16, compute_dtype=jnp.bfloat16,
                 approx_recip=True, s_block=1024, l_block=1024, kv_buffers=None):
        # query/key/value: (L, N, E)
        if key is None:
            key = query
        if value is None:
            value = query
        L, N, E = query.shape
        S = key.shape[0]
        H, d = self.num_heads, self.head_dim

        # projections (plain-JAX glue, f32)
        q = query @ self.Wq.T + self.bq      # (L, N, E)
        k = key @ self.Wk.T + self.bk        # (S, N, E)
        v = value @ self.Wv.T + self.bv      # (S, N, E)

        # (L, N, E) -> (N*H, L, d), matching torch's view(-1, N*H, d).transpose(0, 1);
        # cast to io_dtype here so the pallas_call HBM operands are 2-byte (bf16).
        def to_heads(x, length):
            return jnp.transpose(x.reshape(length, N * H, d), (1, 0, 2)).astype(io_dtype)

        q_h = to_heads(q, L)
        k_h = to_heads(k, S)
        v_h = to_heads(v, S)

        # cosformer positional reweighting coefficients, merged [sin|cos], f32
        m = max(L, S)
        idx = (np.pi / 2.0) * jnp.arange(1, m + 1, dtype=jnp.float32) / m   # (m,)
        sc_q = jnp.stack([jnp.sin(idx[:L]), jnp.cos(idx[:L])], axis=-1)     # (L, 2)
        sc_k = jnp.stack([jnp.sin(idx[:S]), jnp.cos(idx[:S])], axis=-1)     # (S, 2)

        attn = cosformer_attention_core(
            q_h, k_h, v_h, sc_q, sc_k, num_heads=H, eps=eps,
            s_block=s_block, l_block=l_block, compute_dtype=compute_dtype,
            approx_recip=approx_recip, kv_buffers=kv_buffers)               # (N*H, L, d)

        out = jnp.transpose(attn.astype(jnp.float32), (1, 0, 2)).reshape(L, N, E)
        if self.has_outproj:
            out = out @ self.Wo.T + self.bo
        return out


def _reference_forward(mod, query, eps=1e-6):
    """Pure-JAX reference mirroring the PyTorch non-causal forward (f32)."""
    L, N, E = query.shape
    S = L
    H, hd = mod.num_heads, mod.head_dim
    hi = lax.Precision.HIGHEST
    q = jnp.maximum(query @ mod.Wq.T + mod.bq, 0.0)
    k = jnp.maximum(query @ mod.Wk.T + mod.bk, 0.0)
    v = query @ mod.Wv.T + mod.bv
    q = jnp.transpose(q.reshape(L, N * H, hd), (1, 0, 2))
    k = jnp.transpose(k.reshape(S, N * H, hd), (1, 0, 2))
    v = jnp.transpose(v.reshape(S, N * H, hd), (1, 0, 2))
    m = max(L, S)
    wi = (np.pi / 2.0) * jnp.arange(1, m + 1, dtype=jnp.float32).reshape(1, m, 1)
    q_ = jnp.concatenate([q * jnp.sin(wi[:, :L] / m), q * jnp.cos(wi[:, :L] / m)], -1)
    k_ = jnp.concatenate([k * jnp.sin(wi[:, :S] / m), k * jnp.cos(wi[:, :S] / m)], -1)
    kv_ = jnp.einsum('bse,bsd->bed', k_, v, precision=hi)
    z_ = 1.0 / jnp.maximum(jnp.einsum('ble,be->bl', q_, jnp.sum(k_, axis=1),
                                      precision=hi), eps)
    attn = jnp.einsum('ble,bed->bld', q_, kv_, precision=hi) * z_[..., None]
    out = jnp.transpose(attn, (1, 0, 2)).reshape(L, N, E)
    return out @ mod.Wo.T + mod.bo


if __name__ == "__main__":
    L, N, E, H = 8, 2, 32, 4   # seq=8, batch=2, embed=32, heads=4 (head_dim=8)
    root = jax.random.PRNGKey(0)
    k_param, k_in1, k_in2 = jax.random.split(root, 3)

    module = CosformerAttentionPallas(embed_dim=E, num_heads=H, key=k_param)
    query = jax.random.normal(k_in1, (L, N, E), jnp.float32)
    ref = _reference_forward(module, query)

    # 1) structural check: f32 end to end, exact reciprocal, single-tile grid
    out_f32 = jax.block_until_ready(
        module(query, io_dtype=jnp.float32, compute_dtype=jnp.float32,
               approx_recip=False))
    np.testing.assert_allclose(np.asarray(out_f32), np.asarray(ref),
                               rtol=1e-2, atol=1e-2)

    # 2) default fast path: bf16 HBM boundary + bf16 MXU inputs + approx reciprocal
    out_fast = jax.block_until_ready(module(query))
    np.testing.assert_allclose(np.asarray(out_fast), np.asarray(ref),
                               rtol=5e-2, atol=5e-2)

    # 3) multi-tile / padding path: S and L not divisible by the forced tiles,
    #    exercising the kv accumulation across S tiles, L tiling and zero-padding.
    L2 = 20
    query2 = jax.random.normal(k_in2, (L2, N, E), jnp.float32)
    ref2 = _reference_forward(module, query2)
    out_tiled = jax.block_until_ready(
        module(query2, io_dtype=jnp.float32, compute_dtype=jnp.float32,
               approx_recip=False, s_block=8, l_block=16))
    np.testing.assert_allclose(np.asarray(out_tiled), np.asarray(ref2),
                               rtol=1e-2, atol=1e-2)

    print("KERNEL_OK")
</pallas_src>

<mosaic_0001>
module attributes {stable_mosaic.version = 11 : i64} {
  func.func @_cosformer_attn_kernel(%arg0: i32, %arg1: i32, %arg2: i32, %arg3: memref<4x8x8xf32, #tpu.memory_space<vmem>>, %arg4: memref<4x8x8xf32, #tpu.memory_space<vmem>>, %arg5: memref<4x8x8xf32, #tpu.memory_space<vmem>>, %arg6: memref<8x2xf32, #tpu.memory_space<vmem>>, %arg7: memref<8x2xf32, #tpu.memory_space<vmem>>, %arg8: memref<4x8x8xf32, #tpu.memory_space<vmem>>, %arg9: memref<4x16x8xf32, #tpu.memory_space<vmem>>, %arg10: memref<4x8x16xf32, #tpu.memory_space<vmem>>) attributes {dimension_semantics = [#tpu.dimension_semantics<parallel>, #tpu.dimension_semantics<parallel>, #tpu.dimension_semantics<arbitrary>], iteration_bounds = array<i64: 2, 1, 1>, scalar_prefetch = 0 : i64, scratch_operands = 2 : i64, tpu.core_type = #tpu.core_type<tc>, window_params = [{transform_indices = @transform_0, window_bounds = array<i64: 4, 8, 8>}, {transform_indices = @transform_1, window_bounds = array<i64: 4, 8, 8>}, {transform_indices = @transform_2, window_bounds = array<i64: 4, 8, 8>}, {transform_indices = @transform_3, window_bounds = array<i64: 8, 2>}, {transform_indices = @transform_4, window_bounds = array<i64: 8, 2>}, {transform_indices = @transform_5, window_bounds = array<i64: 4, 8, 8>}]} {
    %c0_i32 = arith.constant 0 : i32
    %0 = arith.cmpi eq, %arg2, %c0_i32 : i32
    %1 = arith.extui %0 : i1 to i32
    %c0_i32_0 = arith.constant 0 : i32
    %2 = arith.cmpi ne, %1, %c0_i32_0 : i32
    scf.if %2 {
      %cst_26 = arith.constant 0.000000e+00 : f32
      %28 = vector.broadcast %cst_26 : f32 to vector<4x16x8xf32>
      %c0_27 = arith.constant 0 : index
      %c0_28 = arith.constant 0 : index
      %c0_29 = arith.constant 0 : index
      %29 = vector.load %arg9[%c0_27, %c0_28, %c0_29] : memref<4x16x8xf32, #tpu.memory_space<vmem>>, vector<4x16x8xf32>
      tpu.vector_store %arg9[%c0_27, %c0_28, %c0_29], %28 {strides = array<i32>} : memref<4x16x8xf32, #tpu.memory_space<vmem>>, vector<4x16x8xf32>,
      %cst_30 = arith.constant 0.000000e+00 : f32
      %30 = vector.broadcast %cst_30 : f32 to vector<4x8x16xf32>
      %c0_31 = arith.constant 0 : index
      %c0_32 = arith.constant 0 : index
      %c0_33 = arith.constant 0 : index
      %31 = vector.load %arg10[%c0_31, %c0_32, %c0_33] : memref<4x8x16xf32, #tpu.memory_space<vmem>>, vector<4x8x16xf32>
      tpu.vector_store %arg10[%c0_31, %c0_32, %c0_33], %30 {strides = array<i32>} : memref<4x8x16xf32, #tpu.memory_space<vmem>>, vector<4x8x16xf32>,
    } else {
    }
    %c0 = arith.constant 0 : index
    %c0_1 = arith.constant 0 : index
    %c0_2 = arith.constant 0 : index
    %3 = vector.load %arg4[%c0, %c0_1, %c0_2] : memref<4x8x8xf32, #tpu.memory_space<vmem>>, vector<4x8x8xf32>
    %cst = arith.constant 0.000000e+00 : f32
    %4 = vector.broadcast %cst : f32 to vector<4x8x8xf32>
    %5 = arith.maximumf %3, %4 : vector<4x8x8xf32>
    %c0_3 = arith.constant 0 : index
    %c0_4 = arith.constant 0 : index
    %6 = vector.load %arg7[%c0_3, %c0_4] : memref<8x2xf32, #tpu.memory_space<vmem>>, vector<8x1xf32>
    %c0_5 = arith.constant 0 : index
    %c1 = arith.constant 1 : index
    %7 = vector.load %arg7[%c0_5, %c1] : memref<8x2xf32, #tpu.memory_space<vmem>>, vector<8x1xf32>
    %8 = vector.shape_cast %6 : vector<8x1xf32> to vector<1x8x1xf32>
    %9 = vector.broadcast %8 : vector<1x8x1xf32> to vector<4x8x8xf32>
    %10 = arith.mulf %5, %9 : vector<4x8x8xf32>
    %11 = vector.shape_cast %7 : vector<8x1xf32> to vector<1x8x1xf32>
    %12 = vector.broadcast %11 : vector<1x8x1xf32> to vector<4x8x8xf32>
    %13 = arith.mulf %5, %12 : vector<4x8x8xf32>
    %14 = tpu.concatenate %10, %13 in 2 : vector<4x8x8xf32>, vector<4x8x8xf32> -> vector<4x8x16xf32>
    %cst_6 = arith.constant 1.000000e+00 : f32
    %15 = vector.broadcast %cst_6 : f32 to vector<4x8x8xf32>
    %c0_7 = arith.constant 0 : index
    %c0_8 = arith.constant 0 : index
    %c0_9 = arith.constant 0 : index
    %16 = vector.load %arg10[%c0_7, %c0_8, %c0_9] : memref<4x8x16xf32, #tpu.memory_space<vmem>>, vector<4x8x16xf32>
    %cst_10 = arith.constant dense<0.000000e+00> : vector<4x8x16xf32>
    %17 = tpu.matmul %15, %14, %cst_10 {dimension_numbers = #tpu.dot_dimension_numbers<[2], [1], [1], [2], [0, 0, 0, 1, 1, 2], [0], [0]>} : vector<4x8x8xf32>, vector<4x8x16xf32>, vector<4x8x16xf32> -> vector<4x8x16xf32>
    %18 = arith.addf %16, %17 : vector<4x8x16xf32>
    %c0_11 = arith.constant 0 : index
    %c0_12 = arith.constant 0 : index
    %c0_13 = arith.constant 0 : index
    %19 = vector.load %arg10[%c0_11, %c0_12, %c0_13] : memref<4x8x16xf32, #tpu.memory_space<vmem>>, vector<4x8x16xf32>
    tpu.vector_store %arg10[%c0_11, %c0_12, %c0_13], %18 {strides = array<i32>} : memref<4x8x16xf32, #tpu.memory_space<vmem>>, vector<4x8x16xf32>,
    %c0_14 = arith.constant 0 : index
    %c0_15 = arith.constant 0 : index
    %c0_16 = arith.constant 0 : index
    %20 = vector.load %arg9[%c0_14, %c0_15, %c0_16] : memref<4x16x8xf32, #tpu.memory_space<vmem>>, vector<4x16x8xf32>
    %c0_17 = arith.constant 0 : index
    %c0_18 = arith.constant 0 : index
    %c0_19 = arith.constant 0 : index
    %21 = vector.load %arg5[%c0_17, %c0_18, %c0_19] : memref<4x8x8xf32, #tpu.memory_space<vmem>>, vector<4x8x8xf32>
    %cst_20 = arith.constant dense<0.000000e+00> : vector<4x16x8xf32>
    %22 = tpu.matmul %14, %21, %cst_20 {dimension_numbers = #tpu.dot_dimension_numbers<[1], [1], [2], [2], [0, 0, 0, 2, 1, 2], [0], [0]>} : vector<4x8x16xf32>, vector<4x8x8xf32>, vector<4x16x8xf32> -> vector<4x16x8xf32>
    %23 = arith.addf %20, %22 : vector<4x16x8xf32>
    %c0_21 = arith.constant 0 : index
    %c0_22 = arith.constant 0 : index
    %c0_23 = arith.constant 0 : index
    %24 = vector.load %arg9[%c0_21, %c0_22, %c0_23] : memref<4x16x8xf32, #tpu.memory_space<vmem>>, vector<4x16x8xf32>
    tpu.vector_store %arg9[%c0_21, %c0_22, %c0_23], %23 {strides = array<i32>} : memref<4x16x8xf32, #tpu.memory_space<vmem>>, vector<4x16x8xf32>,
    %c0_i32_24 = arith.constant 0 : i32
    %25 = arith.cmpi eq, %arg2, %c0_i32_24 : i32
    %26 = arith.extui %25 : i1 to i32
    %c0_i32_25 = arith.constant 0 : i32
    %27 = arith.cmpi ne, %26, %c0_i32_25 : i32
    scf.if %27 {
      %c0_26 = arith.constant 0 : index
      %c0_27 = arith.constant 0 : index
      %c0_28 = arith.constant 0 : index
      %28 = vector.load %arg3[%c0_26, %c0_27, %c0_28] : memref<4x8x8xf32, #tpu.memory_space<vmem>>, vector<4x8x8xf32>
      %cst_29 = arith.constant 0.000000e+00 : f32
      %29 = vector.broadcast %cst_29 : f32 to vector<4x8x8xf32>
      %30 = arith.maximumf %28, %29 : vector<4x8x8xf32>
      %c0_30 = arith.constant 0 : index
      %c0_31 = arith.constant 0 : index
      %31 = vector.load %arg6[%c0_30, %c0_31] : memref<8x2xf32, #tpu.memory_space<vmem>>, vector<8x1xf32>
      %c0_32 = arith.constant 0 : index
      %c1_33 = arith.constant 1 : index
      %32 = vector.load %arg6[%c0_32, %c1_33] : memref<8x2xf32, #tpu.memory_space<vmem>>, vector<8x1xf32>
      %33 = vector.shape_cast %31 : vector<8x1xf32> to vector<1x8x1xf32>
      %34 = vector.broadcast %33 : vector<1x8x1xf32> to vector<4x8x8xf32>
      %35 = arith.mulf %30, %34 : vector<4x8x8xf32>
      %36 = vector.shape_cast %32 : vector<8x1xf32> to vector<1x8x1xf32>
      %37 = vector.broadcast %36 : vector<1x8x1xf32> to vector<4x8x8xf32>
      %38 = arith.mulf %30, %37 : vector<4x8x8xf32>
      %39 = tpu.concatenate %35, %38 in 2 : vector<4x8x8xf32>, vector<4x8x8xf32> -> vector<4x8x16xf32>
      %c0_34 = arith.constant 0 : index
      %c0_35 = arith.constant 0 : index
      %c0_36 = arith.constant 0 : index
      %40 = vector.load %arg9[%c0_34, %c0_35, %c0_36] : memref<4x16x8xf32, #tpu.memory_space<vmem>>, vector<4x16x8xf32>
      %cst_37 = arith.constant dense<0.000000e+00> : vector<4x8x8xf32>
      %41 = tpu.matmul %39, %40, %cst_37 {dimension_numbers = #tpu.dot_dimension_numbers<[2], [1], [1], [2], [0, 0, 0, 1, 1, 2], [0], [0]>} : vector<4x8x16xf32>, vector<4x16x8xf32>, vector<4x8x8xf32> -> vector<4x8x8xf32>
      %c0_38 = arith.constant 0 : index
      %c0_39 = arith.constant 0 : index
      %c0_40 = arith.constant 0 : index
      %42 = vector.load %arg10[%c0_38, %c0_39, %c0_40] : memref<4x8x16xf32, #tpu.memory_space<vmem>>, vector<4x1x16xf32>
      %43 = vector.broadcast %42 : vector<4x1x16xf32> to vector<4x8x16xf32>
      %44 = arith.mulf %39, %43 : vector<4x8x16xf32>
      %cst_41 = arith.constant dense<0.000000e+00> : vector<4x8xf32>
      %45 = vector.multi_reduction <add>, %44, %cst_41 [2] : vector<4x8x16xf32> to vector<4x8xf32>
      %46 = vector.shape_cast %45 : vector<4x8xf32> to vector<4x8x1xf32>
      %cst_42 = arith.constant 9.99999997E-7 : f32
      %47 = vector.broadcast %cst_42 : f32 to vector<4x8x1xf32>
      %48 = arith.maximumf %46, %47 : vector<4x8x1xf32>
      %49 = tpu.reciprocal %48 : vector<4x8x1xf32> -> vector<4x8x1xf32>
      %50 = vector.broadcast %49 : vector<4x8x1xf32> to vector<4x8x8xf32>
      %51 = arith.mulf %41, %50 : vector<4x8x8xf32>
      %c0_43 = arith.constant 0 : index
      %c0_44 = arith.constant 0 : index
      %c0_45 = arith.constant 0 : index
      %52 = vector.load %arg8[%c0_43, %c0_44, %c0_45] : memref<4x8x8xf32, #tpu.memory_space<vmem>>, vector<4x8x8xf32>
      tpu.vector_store %arg8[%c0_43, %c0_44, %c0_45], %51 {strides = array<i32>} : memref<4x8x8xf32, #tpu.memory_space<vmem>>, vector<4x8x8xf32>,
    } else {
    }
    return
  }
  func.func @transform_0(%arg0: i32, %arg1: i32, %arg2: i32) -> (i32, i32, i32) {
    %c0_i32 = arith.constant 0 : i32
    %c0_i32_0 = arith.constant 0 : i32
    return %arg0, %arg1, %c0_i32 : i32, i32, i32
  }
  func.func @transform_1(%arg0: i32, %arg1: i32, %arg2: i32) -> (i32, i32, i32) {
    %c0_i32 = arith.constant 0 : i32
    %c0_i32_0 = arith.constant 0 : i32
    return %arg0, %arg2, %c0_i32 : i32, i32, i32
  }
  func.func @transform_2(%arg0: i32, %arg1: i32, %arg2: i32) -> (i32, i32, i32) {
    %c0_i32 = arith.constant 0 : i32
    %c0_i32_0 = arith.constant 0 : i32
    return %arg0, %arg2, %c0_i32 : i32, i32, i32
  }
  func.func @transform_3(%arg0: i32, %arg1: i32, %arg2: i32) -> (i32, i32) {
    %c0_i32 = arith.constant 0 : i32
    %c0_i32_0 = arith.constant 0 : i32
    return %arg1, %c0_i32 : i32, i32
  }
  func.func @transform_4(%arg0: i32, %arg1: i32, %arg2: i32) -> (i32, i32) {
    %c0_i32 = arith.constant 0 : i32
    %c0_i32_0 = arith.constant 0 : i32
    return %arg2, %c0_i32 : i32, i32
  }
  func.func @transform_5(%arg0: i32, %arg1: i32, %arg2: i32) -> (i32, i32, i32) {
    %c0_i32 = arith.constant 0 : i32
    %c0_i32_0 = arith.constant 0 : i32
    return %arg0, %arg1, %c0_i32 : i32, i32, i32
  }
}

</mosaic_0001>

<llo_original>
// kernel: tpu_custom_call.1
$region0: #{tpu_custom_call.1}
  #allocation0 [shape = 'u32[]', space=smem, size = 0x4, offset = 0x4, fixed_abs, tag = 'smem constant byte address 0x4 - core index']
  #allocation1 [shape = 'u32[144,128]{1,0:T(1,128)}', space=vmem, size = 0x12000, scoped, tag = 'internal scratch']
  #allocation2 [shape = 'f32[4,16,8]{2,1,0:T(8,128)}', space=vmem, size = 0x8000, scoped, tag = 'scratch operand']
  #allocation3 [shape = 'f32[4,8,16]{2,1,0:T(8,128)}', space=vmem, size = 0x4000, scoped, tag = 'scratch operand']
  %s0 = inlined_call_operand.hbm [shape: f32[8,8,8], index: 0, kind: input, shape index: {}]
  %s1 = inlined_call_operand.hbm [shape: f32[8,8,8], index: 1, kind: input, shape index: {}]
  %s2 = inlined_call_operand.hbm [shape: f32[8,8,8], index: 2, kind: input, shape index: {}]
  %s3 = inlined_call_operand.vmem [shape: f32[8,2], index: 3, kind: input, shape index: {}]
  %s4 = inlined_call_operand.vmem [shape: f32[8,2], index: 4, kind: input, shape index: {}]
  %s5 = inlined_call_operand.hbm [shape: f32[8,8,8], index: 5, kind: output, shape index: {}]
  %s6 = sld [smem:[#allocation0]]
  $region73: #{tpu_custom_call.1} parent=0
    _
  %s8 = ssub.s32 1, %s6
  %s9 = scalar_select 0, %s8, %s6
  $region1: #{tpu_custom_call.1} parent=0
    #allocation4 [shape = 'u8[32768]{0}', space=vmem, size = 0x8000, scoped, tag = 'input window, operand 0']
    #allocation5 [shape = 's32[2]{0}', space=sflag, size = 0x8, scoped, tag = 'scoped memory for tpu_custom_call.1']
    #allocation6 [shape = 's32[2]{0}', space=sflag, size = 0x8, scoped, tag = 'scoped memory for tpu_custom_call.1']
    #allocation7 [shape = 'u8[32768]{0}', space=vmem, size = 0x8000, scoped, tag = 'input window, operand 1']
    #allocation8 [shape = 's32[2]{0}', space=sflag, size = 0x8, scoped, tag = 'scoped memory for tpu_custom_call.1']
    #allocation9 [shape = 'u8[32768]{0}', space=vmem, size = 0x8000, scoped, tag = 'input window, operand 2']
    #allocation10 [shape = 'u8[32768]{0}', space=vmem, size = 0x8000, scoped, tag = 'output window, operand 0']
    %10 = vsyncpa [#allocation5], 0
    %s11 = scalar_lea.sflag [#allocation5], 1
    %12 = vsyncpa %s11, 0
    %13 = vsyncpa [#allocation8], 0
    %s14 = scalar_lea.sflag [#allocation8], 1
    %15 = vsyncpa %s14, 0
    %16 = vsyncpa [#allocation6], 0
    %s17 = scalar_lea.sflag [#allocation6], 1
    %18 = vsyncpa %s17, 0
    loop: start=0, step=1, limit=4
    $region2: #{tpu_custom_call.1} parent=1 // loop_pre_header
      _
    $region3: #{tpu_custom_call.1} parent=1 // loop_header
      %s20 = sphi 0, %s24
      %p21 = scmp.ge.s32.totalorder %s20, 4
      %s27 = sphi 0, %s46
      %s28 = sphi 0, %s42
      %s29 = sphi 0, %s38
      %s30 = sphi 0, %s27
      %s31 = sphi 0, %s28
      %s32 = sphi 0, %s29
      %s33 = sphi 0, %s30
      %s34 = sphi 0, %s31
      %s35 = sphi 0, %s32
      %s51 = sphi 0, %s53
      %s54 = sphi 0, %s51
      %s55 = sphi 0, %s54
      %s71 = sphi 0, %s55
      %s79 = sphi 0, %s81
      %s82 = sphi 0, %s79
      %s83 = sphi 0, %s82
      %s99 = sphi 0, %s83
      %s107 = sphi 0, %s109
      %s110 = sphi 0, %s107
      %s111 = sphi 0, %s110
      %s127 = sphi 0, %s111
      %s133 = sphi 0, %s135
      %s136 = sphi 0, %s133
      %s137 = sphi 0, %s136
      %s153 = sphi 0, %s137
      %s159 = sphi 0, %s161
      %s162 = sphi 0, %s159
      %s163 = sphi 0, %s162
      %s179 = sphi 0, %s163
      %s187 = sphi 0, %s189
      %s190 = sphi 0, %s187
      %s191 = sphi 0, %s190
      %s207 = sphi 0, %s191
    $region4: #{tpu_custom_call.1} parent=1 // loop_header_branch
      %23 = sbr.rel (%p21) target = $region8
    $region5: #{tpu_custom_call.1} parent=1 // loop_body
      %s25 = ssub.s32 %s20, 1
      %s26 = ssub.s32 %s20, 2
      %s36 = sadd.s32 1, %s29
      %p37 = scmp.ge.s32.totalorder %s36, 1
      %s38 = scalar_select %p37, 0, %s36
      %s39 = sadd.s32 1, %s28
      %s40 = scalar_select %p37, %s39, %s28
      %p41 = scmp.ge.s32.totalorder %s40, 1
      %s42 = scalar_select %p41, 0, %s40
      %s43 = sadd.s32 1, %s27
      %s44 = scalar_select %p41, %s43, %s27
      %p45 = scmp.ge.s32.totalorder %s44, 2
      %s46 = scalar_select %p45, 0, %s44
      %s47 = ssub.s32 %s27, %s46
      %s48 = ssub.s32 %s28, %s42
      %s49 = sor.u32 %s47, %s48
      %p50 = scmp.eq.s32.totalorder %s49, 0
      %s52 = sadd.s32 %s51, 1
      %s53 = scalar_select %p50, %s51, %s52
      %p56 = pneg %p50
      %p57 = scmp.eq.s32.totalorder %s20, 1
      %p58 = por %p56, %p57
      %p59 = scmp.ne.s32.totalorder %s51, %s54
      %p60 = scmp.eq.s32.totalorder %s20, 0
      %p61 = por %p59, %p60
      %p62 = scmp.ne.s32.totalorder %s51, %s54
      %p63 = scmp.eq.s32.totalorder %s25, 1
      %p64 = por %p62, %p63
      %p65 = scmp.ne.s32.totalorder %s54, %s55
      %p66 = scmp.eq.s32.totalorder %s25, 0
      %p67 = por %p65, %p66
      %p68 = scmp.ne.s32.totalorder %s54, %s55
      %p69 = scmp.eq.s32.totalorder %s26, 1
      %p70 = por %p68, %p69
      %p72 = scmp.ne.s32.totalorder %s55, %s71
      %p73 = scmp.eq.s32.totalorder %s26, 0
      %p74 = por %p72, %p73
      %s75 = ssub.s32 %s27, %s46
      %s76 = ssub.s32 %s29, %s38
      %s77 = sor.u32 %s75, %s76
      %p78 = scmp.eq.s32.totalorder %s77, 0
      %s80 = sadd.s32 %s79, 1
      %s81 = scalar_select %p78, %s79, %s80
      %p84 = pneg %p78
      %p85 = scmp.eq.s32.totalorder %s20, 1
      %p86 = por %p84, %p85
      %p87 = scmp.ne.s32.totalorder %s79, %s82
      %p88 = scmp.eq.s32.totalorder %s20, 0
      %p89 = por %p87, %p88
      %p90 = scmp.ne.s32.totalorder %s79, %s82
      %p91 = scmp.eq.s32.totalorder %s25, 1
      %p92 = por %p90, %p91
      %p93 = scmp.ne.s32.totalorder %s82, %s83
      %p94 = scmp.eq.s32.totalorder %s25, 0
      %p95 = por %p93, %p94
      %p96 = scmp.ne.s32.totalorder %s82, %s83
      %p97 = scmp.eq.s32.totalorder %s26, 1
      %p98 = por %p96, %p97
      %p100 = scmp.ne.s32.totalorder %s83, %s99
      %p101 = scmp.eq.s32.totalorder %s26, 0
      %p102 = por %p100, %p101
      %s103 = ssub.s32 %s27, %s46
      %s104 = ssub.s32 %s29, %s38
      %s105 = sor.u32 %s103, %s104
      %p106 = scmp.eq.s32.totalorder %s105, 0
      %s108 = sadd.s32 %s107, 1
      %s109 = scalar_select %p106, %s107, %s108
      %p112 = pneg %p106
      %p113 = scmp.eq.s32.totalorder %s20, 1
      %p114 = por %p112, %p113
      %p115 = scmp.ne.s32.totalorder %s107, %s110
      %p116 = scmp.eq.s32.totalorder %s20, 0
      %p117 = por %p115, %p116
      %p118 = scmp.ne.s32.totalorder %s107, %s110
      %p119 = scmp.eq.s32.totalorder %s25, 1
      %p120 = por %p118, %p119
      %p121 = scmp.ne.s32.totalorder %s110, %s111
      %p122 = scmp.eq.s32.totalorder %s25, 0
      %p123 = por %p121, %p122
      %p124 = scmp.ne.s32.totalorder %s110, %s111
      %p125 = scmp.eq.s32.totalorder %s26, 1
      %p126 = por %p124, %p125
      %p128 = scmp.ne.s32.totalorder %s111, %s127
      %p129 = scmp.eq.s32.totalorder %s26, 0
      %p130 = por %p128, %p129
      %s131 = ssub.s32 %s28, %s42
      %p132 = scmp.eq.s32.totalorder %s131, 0
      %s134 = sadd.s32 %s133, 1
      %s135 = scalar_select %p132, %s133, %s134
      %p138 = pneg %p132
      %p139 = scmp.eq.s32.totalorder %s20, 1
      %p140 = por %p138, %p139
      %p141 = scmp.ne.s32.totalorder %s133, %s136
      %p142 = scmp.eq.s32.totalorder %s20, 0
      %p143 = por %p141, %p142
      %p144 = scmp.ne.s32.totalorder %s133, %s136
      %p145 = scmp.eq.s32.totalorder %s25, 1
      %p146 = por %p144, %p145
      %p147 = scmp.ne.s32.totalorder %s136, %s137
      %p148 = scmp.eq.s32.totalorder %s25, 0
      %p149 = por %p147, %p148
      %p150 = scmp.ne.s32.totalorder %s136, %s137
      %p151 = scmp.eq.s32.totalorder %s26, 1
      %p152 = por %p150, %p151
      %p154 = scmp.ne.s32.totalorder %s137, %s153
      %p155 = scmp.eq.s32.totalorder %s26, 0
      %p156 = por %p154, %p155
      %s157 = ssub.s32 %s29, %s38
      %p158 = scmp.eq.s32.totalorder %s157, 0
      %s160 = sadd.s32 %s159, 1
      %s161 = scalar_select %p158, %s159, %s160
      %p164 = pneg %p158
      %p165 = scmp.eq.s32.totalorder %s20, 1
      %p166 = por %p164, %p165
      %p167 = scmp.ne.s32.totalorder %s159, %s162
      %p168 = scmp.eq.s32.totalorder %s20, 0
      %p169 = por %p167, %p168
      %p170 = scmp.ne.s32.totalorder %s159, %s162
      %p171 = scmp.eq.s32.totalorder %s25, 1
      %p172 = por %p170, %p171
      %p173 = scmp.ne.s32.totalorder %s162, %s163
      %p174 = scmp.eq.s32.totalorder %s25, 0
      %p175 = por %p173, %p174
      %p176 = scmp.ne.s32.totalorder %s162, %s163
      %p177 = scmp.eq.s32.totalorder %s26, 1
      %p178 = por %p176, %p177
      %p180 = scmp.ne.s32.totalorder %s163, %s179
      %p181 = scmp.eq.s32.totalorder %s26, 0
      %p182 = por %p180, %p181
      %s183 = ssub.s32 %s27, %s46
      %s184 = ssub.s32 %s28, %s42
      %s185 = sor.u32 %s183, %s184
      %p186 = scmp.eq.s32.totalorder %s185, 0
      %s188 = sadd.s32 %s187, 1
      %s189 = scalar_select %p186, %s187, %s188
      %p192 = pneg %p186
      %p193 = scmp.eq.s32.totalorder %s20, 1
      %p194 = por %p192, %p193
      %p195 = scmp.ne.s32.totalorder %s187, %s190
      %p196 = scmp.eq.s32.totalorder %s20, 0
      %p197 = por %p195, %p196
      %p198 = scmp.ne.s32.totalorder %s187, %s190
      %p199 = scmp.eq.s32.totalorder %s25, 1
      %p200 = por %p198, %p199
      %p201 = scmp.ne.s32.totalorder %s190, %s191
      %p202 = scmp.eq.s32.totalorder %s25, 0
      %p203 = por %p201, %p202
      %p204 = scmp.ne.s32.totalorder %s190, %s191
      %p205 = scmp.eq.s32.totalorder %s26, 1
      %p206 = por %p204, %p205
      %p208 = scmp.ne.s32.totalorder %s191, %s207
      %p209 = scmp.eq.s32.totalorder %s26, 0
      %p210 = por %p208, %p209
      %p211 = scmp.le.s32.totalorder 1, %s20
      %p212 = scmp.lt.s32.totalorder %s20, 3
      %p213 = pnand %p211, %p212
      %p214 = pneg %p213
      // Predicated region
      $region9: #{tpu_custom_call.1} parent=5 // pred_check
        _
      $region10: #{tpu_custom_call.1} parent=5 // pred_check_branch
        %216 = sbr.rel (%p213) target = $region12
      $region11: #{tpu_custom_call.1} parent=5 // pred_region
        %s217 = ssub.s32 %s20, 1
        // Predicated region
        $region13: #{tpu_custom_call.1} parent=11 // pred_check
          %p218 = pneg %p149
        $region14: #{tpu_custom_call.1} parent=11 // pred_check_branch
          %220 = sbr.rel (%p218) target = $region16
        $region15: #{tpu_custom_call.1} parent=11 // pred_region
          %p221 = scmp.lt.s32.totalorder %s31, 0
          %s222 = scalar_select %p221, %s31, 0
          %s223 = smul.addr %s222, 8
          %s224 = scalar_lea.vmem %s3, %s223
        $region16: #{tpu_custom_call.1} parent=11 // pred_fallthru
          _
        // Predicated region
        $region17: #{tpu_custom_call.1} parent=11 // pred_check
          %p225 = pneg %p175
        $region18: #{tpu_custom_call.1} parent=11 // pred_check_branch
          %227 = sbr.rel (%p225) target = $region20
        $region19: #{tpu_custom_call.1} parent=11 // pred_region
          %p228 = scmp.lt.s32.totalorder %s32, 0
          %s229 = scalar_select %p228, %s32, 0
          %s230 = smul.addr %s229, 8
          %s231 = scalar_lea.vmem %s4, %s230
        $region20: #{tpu_custom_call.1} parent=11 // pred_fallthru
          _
      $region12: #{tpu_custom_call.1} parent=5 // pred_fallthru
        _
      %p232 = scmp.lt.s32.totalorder %s20, 2
      // Predicated region
      $region21: #{tpu_custom_call.1} parent=5 // pred_check
        %p233 = pneg %p232
      $region22: #{tpu_custom_call.1} parent=5 // pred_check_branch
        %235 = sbr.rel (%p233) target = $region24
      $region23: #{tpu_custom_call.1} parent=5 // pred_region
        // Predicated region
        $region25: #{tpu_custom_call.1} parent=23 // pred_check
          %p236 = pneg %p61
        $region26: #{tpu_custom_call.1} parent=23 // pred_check_branch
          %238 = sbr.rel (%p236) target = $region28
        $region27: #{tpu_custom_call.1} parent=23 // pred_region
          %s239 = sand.u32 %s51, 1
          %s240 = scalar_lea.sflag [#allocation5], %s239
          %s241 = sand.u32 %s51, 1
          %s242 = smul.addr %s241, 32
          %s243 = scalar_lea.vmem [#allocation4], %s242
          %s244 = smul.u32 4, %s27
          %s246 = ssub.s32 512, 512
          %247 = vsyncadd %s240, %s246
          %s248 = sadd.s32 %s28, %s244
          %s249 = smul.addr %s248, 128
          %s250 = scalar_lea.hbm %s0, %s249
          %s251 = sshll.u32 %s243, 4
          %s252 = int_to_ptr.vmem [resolvable:$true] %s251
          %257 = dma.hbm_to_vmem [thread:$0]  %s250, 512, %s252, %s240, 128, 128, 8
        $region28: #{tpu_custom_call.1} parent=23 // pred_fallthru
          _
        // Predicated region
        $region29: #{tpu_custom_call.1} parent=23 // pred_check
          %p258 = pneg %p89
        $region30: #{tpu_custom_call.1} parent=23 // pred_check_branch
          %260 = sbr.rel (%p258) target = $region32
        $region31: #{tpu_custom_call.1} parent=23 // pred_region
          %s261 = sand.u32 %s20, 1
          %s262 = scalar_lea.sflag [#allocation8], %s261
          %s263 = sand.u32 %s79, 1
          %s264 = smul.addr %s263, 32
          %s265 = scalar_lea.vmem [#allocation7], %s264
          %s266 = smul.u32 4, %s27
          %s268 = ssub.s32 512, 512
          %269 = vsyncadd %s262, %s268
          %s270 = sadd.s32 %s29, %s266
          %s271 = smul.addr %s270, 128
          %s272 = scalar_lea.hbm %s1, %s271
          %s273 = sshll.u32 %s265, 4
          %s274 = int_to_ptr.vmem [resolvable:$true] %s273
          %279 = dma.hbm_to_vmem [thread:$0]  %s272, 512, %s274, %s262, 128, 128, 8
        $region32: #{tpu_custom_call.1} parent=23 // pred_fallthru
          _
        // Predicated region
        $region33: #{tpu_custom_call.1} parent=23 // pred_check
          %p280 = pneg %p117
        $region34: #{tpu_custom_call.1} parent=23 // pred_check_branch
          %282 = sbr.rel (%p280) target = $region36
        $region35: #{tpu_custom_call.1} parent=23 // pred_region
          %s283 = sand.u32 %s20, 1
          %s284 = scalar_lea.sflag [#allocation8], %s283
          %s285 = sand.u32 %s107, 1
          %s286 = smul.addr %s285, 32
          %s287 = scalar_lea.vmem [#allocation9], %s286
          %s288 = smul.u32 4, %s27
          %s290 = ssub.s32 512, 512
          %291 = vsyncadd %s284, %s290
          %s292 = sadd.s32 %s29, %s288
          %s293 = smul.addr %s292, 128
          %s294 = scalar_lea.hbm %s2, %s293
          %s295 = sshll.u32 %s287, 4
          %s296 = int_to_ptr.vmem [resolvable:$true] %s295
          %301 = dma.hbm_to_vmem [thread:$0]  %s294, 512, %s296, %s284, 128, 128, 8
        $region36: #{tpu_custom_call.1} parent=23 // pred_fallthru
          _
      $region24: #{tpu_custom_call.1} parent=5 // pred_fallthru
        _
      %p302 = scmp.le.s32.totalorder 1, %s20
      %p303 = scmp.lt.s32.totalorder %s20, 3
      %p304 = pnand %p302, %p303
      %p305 = pneg %p304
      // Predicated region
      $region37: #{tpu_custom_call.1} parent=5 // pred_check
        _
      $region38: #{tpu_custom_call.1} parent=5 // pred_check_branch
        %307 = sbr.rel (%p304) target = $region40
      $region39: #{tpu_custom_call.1} parent=5 // pred_region
        %s308 = ssub.s32 %s20, 1
        %s309 = sand.u32 %s54, 1
        %s310 = scalar_lea.sflag [#allocation5], %s309
        %s311 = sand.u32 %s54, 1
        %s312 = smul.addr %s311, 32
        %s313 = scalar_lea.vmem [#allocation4], %s312
        // Predicated region
        $region41: #{tpu_custom_call.1} parent=39 // pred_check
          %p314 = pneg %p67
        $region42: #{tpu_custom_call.1} parent=39 // pred_check_branch
          %316 = sbr.rel (%p314) target = $region44
        $region43: #{tpu_custom_call.1} parent=39 // pred_region
          %317 = dma.done %s310, 512
        $region44: #{tpu_custom_call.1} parent=39 // pred_fallthru
          _
        %s318 = sand.u32 %s25, 1
        %s319 = scalar_lea.sflag [#allocation8], %s318
        %s320 = sand.u32 %s82, 1
        %s321 = smul.addr %s320, 32
        %s322 = scalar_lea.vmem [#allocation7], %s321
        // Predicated region
        $region45: #{tpu_custom_call.1} parent=39 // pred_check
          %p323 = pneg %p95
        $region46: #{tpu_custom_call.1} parent=39 // pred_check_branch
          %325 = sbr.rel (%p323) target = $region48
        $region47: #{tpu_custom_call.1} parent=39 // pred_region
          %326 = dma.done %s319, 512
        $region48: #{tpu_custom_call.1} parent=39 // pred_fallthru
          _
        %s327 = sand.u32 %s25, 1
        %s328 = scalar_lea.sflag [#allocation8], %s327
        %s329 = sand.u32 %s110, 1
        %s330 = smul.addr %s329, 32
        %s331 = scalar_lea.vmem [#allocation9], %s330
        // Predicated region
        $region49: #{tpu_custom_call.1} parent=39 // pred_check
          %p332 = pneg %p123
        $region50: #{tpu_custom_call.1} parent=39 // pred_check_branch
          %334 = sbr.rel (%p332) target = $region52
        $region51: #{tpu_custom_call.1} parent=39 // pred_region
          %335 = dma.done %s328, 512
        $region52: #{tpu_custom_call.1} parent=39 // pred_fallthru
          _
        %s336 = sand.u32 %s54, 1
        %s337 = scalar_lea.sflag [#allocation5], %s336
        %s338 = sand.u32 %s54, 1
        %s339 = smul.addr %s338, 32
        %s340 = scalar_lea.vmem [#allocation4], %s339
        %p341 = pneg %p67
        %p342 = pneg %p64
        %s343 = sand.u32 %s25, 1
        %s344 = scalar_lea.sflag [#allocation8], %s343
        %s345 = sand.u32 %s82, 1
        %s346 = smul.addr %s345, 32
        %s347 = scalar_lea.vmem [#allocation7], %s346
        %p348 = pneg %p95
        %p349 = pneg %p92
        %s350 = sand.u32 %s25, 1
        %s351 = scalar_lea.sflag [#allocation8], %s350
        %s352 = sand.u32 %s110, 1
        %s353 = smul.addr %s352, 32
        %s354 = scalar_lea.vmem [#allocation9], %s353
        %p355 = pneg %p123
        %p356 = pneg %p120
        %p357 = scmp.lt.s32.totalorder %s31, 0
        %s358 = scalar_select %p357, %s31, 0
        %s359 = smul.addr %s358, 8
        %s360 = scalar_lea.vmem %s3, %s359
        %p361 = pneg %p149
        %p362 = pneg %p146
        %p363 = scmp.lt.s32.totalorder %s32, 0
        %s364 = scalar_select %p363, %s32, 0
        %s365 = smul.addr %s364, 8
        %s366 = scalar_lea.vmem %s4, %s365
        %p367 = pneg %p175
        %p368 = pneg %p172
        %p369 = pneg %p203
        %p370 = pneg %p200
        %s371 = sand.u32 %s190, 1
        %s372 = scalar_lea.sflag [#allocation6], %s371
        %s373 = sand.u32 %s190, 1
        %s374 = smul.addr %s373, 32
        %s375 = scalar_lea.vmem [#allocation10], %s374
        %s376 = smul.u32 4, %s30
        %s377 = smul.u32 4, %s30
        %s378 = smul.u32 4, %s30
        %p379 = scmp.lt.s32.totalorder %s31, 0
        %s380 = scalar_select %p379, %s31, 0
        %s381 = smul.addr %s380, 8
        %s382 = scalar_lea.vmem %s3, %s381
        %p383 = scmp.lt.s32.totalorder %s32, 0
        %s384 = scalar_select %p383, %s32, 0
        %s385 = smul.addr %s384, 8
        %s386 = scalar_lea.vmem %s4, %s385
        %s387 = smul.u32 4, %s30
        %p388 = scmp.eq.s32.totalorder %s32, 0
        // Predicated region
        $region53: #{tpu_custom_call.1} parent=39 // pred_check
          %p389 = pneg %p388
        $region54: #{tpu_custom_call.1} parent=39 // pred_check_branch
          %391 = sbr.rel (%p389) target = $region56
        $region55: #{tpu_custom_call.1} parent=39 // pred_region
          %vm392 = vcmask 64512
          %393 = vst.msk [vmem:[#allocation2] sm:$0xff] %vm392, 0.0
          %394 = vst.msk [vmem:[#allocation2 + $0x8] sm:$0xff] %vm392, 0.0
          %395 = vst.msk [vmem:[#allocation2 + $0x10] sm:$0xff] %vm392, 0.0
          %396 = vst.msk [vmem:[#allocation2 + $0x18] sm:$0xff] %vm392, 0.0
          %397 = vst.msk [vmem:[#allocation2 + $0x20] sm:$0xff] %vm392, 0.0
          %398 = vst.msk [vmem:[#allocation2 + $0x28] sm:$0xff] %vm392, 0.0
          %399 = vst.msk [vmem:[#allocation2 + $0x30] sm:$0xff] %vm392, 0.0
          %400 = vst.msk [vmem:[#allocation2 + $0x38] sm:$0xff] %vm392, 0.0
          %vm401 = vcmask 130048
          %402 = vst.msk [vmem:[#allocation3] sm:$0xff] %vm401, 0.0
          %403 = vst.msk [vmem:[#allocation3 + $0x8] sm:$0xff] %vm401, 0.0
          %404 = vst.msk [vmem:[#allocation3 + $0x10] sm:$0xff] %vm401, 0.0
          %405 = vst.msk [vmem:[#allocation3 + $0x18] sm:$0xff] %vm401, 0.0
        $region56: #{tpu_custom_call.1} parent=39 // pred_fallthru
          _
        %v406 = vld [vmem:[%s322] sm:$0xff]
        %v407 = vld [vmem:[%s322 + $0x8] sm:$0xff]
        %v408 = vld [vmem:[%s322 + $0x10] sm:$0xff]
        %v409 = vld [vmem:[%s322 + $0x18] sm:$0xff]
        %v410 = vmax.f32 %v406, 0.0
        %v411 = vmax.f32 %v407, 0.0
        %v412 = vmax.f32 %v408, 0.0
        %v413 = vmax.f32 %v409, 0.0
        %v414 = vld [vmem:[%s386] sm:$0xff]
        %416 = vset.pattern.permute.xlu0 0
        %417 = vperm.xlu0 %416, %v414
        %v418 = vpop.permute.xlu0 %417
        %v420 = vmul.f32 %v410, %v418
        %v421 = vmul.f32 %v411, %v418
        %v422 = vmul.f32 %v412, %v418
        %v423 = vmul.f32 %v413, %v418
        %424 = vset.pattern.permute.xlu0 1
        %425 = vperm.xlu0 %424, %v414
        %v426 = vpop.permute.xlu0 %425
        %v428 = vmul.f32 %v410, %v426
        %v429 = vmul.f32 %v411, %v426
        %v430 = vmul.f32 %v412, %v426
        %v431 = vmul.f32 %v413, %v426
        %436 = vrot.lane.b32.xlu0 %v428, 8
        %v437 = vpop.permute.xlu0 %436
        %438 = vrot.lane.b32.xlu0 %v429, 8
        %v439 = vpop.permute.xlu0 %438
        %440 = vrot.lane.b32.xlu0 %v430, 8
        %v441 = vpop.permute.xlu0 %440
        %442 = vrot.lane.b32.xlu0 %v431, 8
        %v443 = vpop.permute.xlu0 %442
        %vm448 = vcmask 64512
        %v449 = vsel %vm448, %v420, %v437
        %v450 = vsel %vm448, %v421, %v439
        %v451 = vsel %vm448, %v422, %v441
        %v452 = vsel %vm448, %v423, %v443
        %v453 = vld [vmem:[#allocation3] sm:$0xff]
        %v454 = vld [vmem:[#allocation3 + $0x8] sm:$0xff]
        %v455 = vld [vmem:[#allocation3 + $0x10] sm:$0xff]
        %v456 = vld [vmem:[#allocation3 + $0x18] sm:$0xff]
        %v458 = vsel %vm448, 1.0, 0
        %460 = vmatprep.subr.mxu0 0.0
        %461 = vmatpush1.msra.mxu0 0.0
        %462 = vmatprep.subr.mxu0 0.0
        %463 = vmatpush1.msra.mxu0 0.0
        %464 = vmatprep.subr.mxu0 0.0
        %465 = vmatpush1.msra.mxu0 0.0
        %466 = vmatprep.subr.mxu0 0.0
        %467 = vmatpush1.msra.mxu0 0.0
        %468 = vmatprep.subr.mxu0 0.0
        %469 = vmatpush1.msra.mxu0 0.0
        %470 = vmatprep.subr.mxu0 0.0
        %471 = vmatpush1.msra.mxu0 0.0
        %472 = vmatprep.subr.mxu0 0.0
        %473 = vmatpush1.msra.mxu0 0.0
        %474 = vmatprep.subr.mxu0 0.0
        %475 = vmatpush1.msra.mxu0 0.0
        %476 = vmatprep.subr.mxu0 0.0
        %477 = vmatpush1.msra.mxu0 0.0
        %478 = vmatprep.subr.mxu0 0.0
        %479 = vmatpush1.msra.mxu0 0.0
        %480 = vmatprep.subr.mxu0 0.0
        %481 = vmatpush1.msra.mxu0 0.0
        %482 = vmatprep.subr.mxu0 0.0
        %483 = vmatpush1.msra.mxu0 0.0
        %484 = vmatprep.subr.mxu0 0.0
        %485 = vmatpush1.msra.mxu0 0.0
        %486 = vmatprep.subr.mxu0 0.0
        %487 = vmatpush1.msra.mxu0 0.0
        %488 = vmatprep.subr.mxu0 0.0
        %489 = vmatpush1.msra.mxu0 0.0
        %490 = vmatprep.subr.mxu0 0.0
        %491 = vmatpush1.msra.mxu0 %v449
        %492 = vmatprep.subr.mxu0 0.0
        %493 = vmatpush2.msra.mxu0 0.0
        %494 = vmatprep.subr.mxu0 0.0
        %495 = vmatpush2.msra.mxu0 0.0
        %496 = vmatprep.subr.mxu0 0.0
        %497 = vmatpush2.msra.mxu0 0.0
        %498 = vmatprep.subr.mxu0 0.0
        %499 = vmatpush2.msra.mxu0 0.0
        %500 = vmatprep.subr.mxu0 0.0
        %501 = vmatpush2.msra.mxu0 0.0
        %502 = vmatprep.subr.mxu0 0.0
        %503 = vmatpush2.msra.mxu0 0.0
        %504 = vmatprep.subr.mxu0 0.0
        %505 = vmatpush2.msra.mxu0 0.0
        %506 = vmatprep.subr.mxu0 0.0
        %507 = vmatpush2.msra.mxu0 0.0
        %508 = vmatprep.subr.mxu0 0.0
        %509 = vmatpush2.msra.mxu0 0.0
        %510 = vmatprep.subr.mxu0 0.0
        %511 = vmatpush2.msra.mxu0 0.0
        %512 = vmatprep.subr.mxu0 0.0
        %513 = vmatpush2.msra.mxu0 0.0
        %514 = vmatprep.subr.mxu0 0.0
        %515 = vmatpush2.msra.mxu0 0.0
        %516 = vmatprep.subr.mxu0 0.0
        %517 = vmatpush2.msra.mxu0 0.0
        %518 = vmatprep.subr.mxu0 0.0
        %519 = vmatpush2.msra.mxu0 0.0
        %520 = vmatprep.subr.mxu0 0.0
        %521 = vmatpush2.msra.mxu0 0.0
        %522 = vmatprep.subr.mxu0 0.0
        %523 = vmatpush2.msra.mxu0 0.0
        %524 = vmatprep.mubr.f32.mxu0 0.0
        %525 = vmatmul.mubr.f32.gmra.mxu0 %v458
        %v526 = vpop.f32.mrf.mxu0
        %v527 = vadd.f32 0.0, %v526
        %v528 = vpop.f32.mrf.mxu0
        %529 = vdwg.mxu0
        %530 = vmatprep.subr.mxu0 0.0
        %531 = vmatpush1.msra.mxu0 0.0
        %532 = vmatprep.subr.mxu0 0.0
        %533 = vmatpush1.msra.mxu0 0.0
        %534 = vmatprep.subr.mxu0 0.0
        %535 = vmatpush1.msra.mxu0 0.0
        %536 = vmatprep.subr.mxu0 0.0
        %537 = vmatpush1.msra.mxu0 0.0
        %538 = vmatprep.subr.mxu0 0.0
        %539 = vmatpush1.msra.mxu0 0.0
        %540 = vmatprep.subr.mxu0 0.0
        %541 = vmatpush1.msra.mxu0 0.0
        %542 = vmatprep.subr.mxu0 0.0
        %543 = vmatpush1.msra.mxu0 0.0
        %544 = vmatprep.subr.mxu0 0.0
        %545 = vmatpush1.msra.mxu0 0.0
        %546 = vmatprep.subr.mxu0 0.0
        %547 = vmatpush1.msra.mxu0 0.0
        %548 = vmatprep.subr.mxu0 0.0
        %549 = vmatpush1.msra.mxu0 0.0
        %550 = vmatprep.subr.mxu0 0.0
        %551 = vmatpush1.msra.mxu0 0.0
        %552 = vmatprep.subr.mxu0 0.0
        %553 = vmatpush1.msra.mxu0 0.0
        %554 = vmatprep.subr.mxu0 0.0
        %555 = vmatpush1.msra.mxu0 0.0
        %556 = vmatprep.subr.mxu0 0.0
        %557 = vmatpush1.msra.mxu0 0.0
        %558 = vmatprep.subr.mxu0 0.0
        %559 = vmatpush1.msra.mxu0 0.0
        %560 = vmatprep.subr.mxu0 0.0
        %561 = vmatpush1.msra.mxu0 %v450
        %562 = vmatprep.subr.mxu0 0.0
        %563 = vmatpush2.msra.mxu0 0.0
        %564 = vmatprep.subr.mxu0 0.0
        %565 = vmatpush2.msra.mxu0 0.0
        %566 = vmatprep.subr.mxu0 0.0
        %567 = vmatpush2.msra.mxu0 0.0
        %568 = vmatprep.subr.mxu0 0.0
        %569 = vmatpush2.msra.mxu0 0.0
        %570 = vmatprep.subr.mxu0 0.0
        %571 = vmatpush2.msra.mxu0 0.0
        %572 = vmatprep.subr.mxu0 0.0
        %573 = vmatpush2.msra.mxu0 0.0
        %574 = vmatprep.subr.mxu0 0.0
        %575 = vmatpush2.msra.mxu0 0.0
        %576 = vmatprep.subr.mxu0 0.0
        %577 = vmatpush2.msra.mxu0 0.0
        %578 = vmatprep.subr.mxu0 0.0
        %579 = vmatpush2.msra.mxu0 0.0
        %580 = vmatprep.subr.mxu0 0.0
        %581 = vmatpush2.msra.mxu0 0.0
        %582 = vmatprep.subr.mxu0 0.0
        %583 = vmatpush2.msra.mxu0 0.0
        %584 = vmatprep.subr.mxu0 0.0
        %585 = vmatpush2.msra.mxu0 0.0
        %586 = vmatprep.subr.mxu0 0.0
        %587 = vmatpush2.msra.mxu0 0.0
        %588 = vmatprep.subr.mxu0 0.0
        %589 = vmatpush2.msra.mxu0 0.0
        %590 = vmatprep.subr.mxu0 0.0
        %591 = vmatpush2.msra.mxu0 0.0
        %592 = vmatprep.subr.mxu0 0.0
        %593 = vmatpush2.msra.mxu0 0.0
        %594 = vmatprep.mubr.f32.mxu0 0.0
        %595 = vmatmul.mubr.f32.gmra.mxu0 %v458
        %v596 = vpop.f32.mrf.mxu0
        %v597 = vadd.f32 0.0, %v596
        %v598 = vpop.f32.mrf.mxu0
        %599 = vdwg.mxu0
        %600 = vmatprep.subr.mxu0 0.0
        %601 = vmatpush1.msra.mxu0 0.0
        %602 = vmatprep.subr.mxu0 0.0
        %603 = vmatpush1.msra.mxu0 0.0
        %604 = vmatprep.subr.mxu0 0.0
        %605 = vmatpush1.msra.mxu0 0.0
        %606 = vmatprep.subr.mxu0 0.0
        %607 = vmatpush1.msra.mxu0 0.0
        %608 = vmatprep.subr.mxu0 0.0
        %609 = vmatpush1.msra.mxu0 0.0
        %610 = vmatprep.subr.mxu0 0.0
        %611 = vmatpush1.msra.mxu0 0.0
        %612 = vmatprep.subr.mxu0 0.0
        %613 = vmatpush1.msra.mxu0 0.0
        %614 = vmatprep.subr.mxu0 0.0
        %615 = vmatpush1.msra.mxu0 0.0
        %616 = vmatprep.subr.mxu0 0.0
        %617 = vmatpush1.msra.mxu0 0.0
        %618 = vmatprep.subr.mxu0 0.0
        %619 = vmatpush1.msra.mxu0 0.0
        %620 = vmatprep.subr.mxu0 0.0
        %621 = vmatpush1.msra.mxu0 0.0
        %622 = vmatprep.subr.mxu0 0.0
        %623 = vmatpush1.msra.mxu0 0.0
        %624 = vmatprep.subr.mxu0 0.0
        %625 = vmatpush1.msra.mxu0 0.0
        %626 = vmatprep.subr.mxu0 0.0
        %627 = vmatpush1.msra.mxu0 0.0
        %628 = vmatprep.subr.mxu0 0.0
        %629 = vmatpush1.msra.mxu0 0.0
        %630 = vmatprep.subr.mxu0 0.0
        %631 = vmatpush1.msra.mxu0 %v451
        %632 = vmatprep.subr.mxu0 0.0
        %633 = vmatpush2.msra.mxu0 0.0
        %634 = vmatprep.subr.mxu0 0.0
        %635 = vmatpush2.msra.mxu0 0.0
        %636 = vmatprep.subr.mxu0 0.0
        %637 = vmatpush2.msra.mxu0 0.0
        %638 = vmatprep.subr.mxu0 0.0
        %639 = vmatpush2.msra.mxu0 0.0
        %640 = vmatprep.subr.mxu0 0.0
        %641 = vmatpush2.msra.mxu0 0.0
        %642 = vmatprep.subr.mxu0 0.0
        %643 = vmatpush2.msra.mxu0 0.0
        %644 = vmatprep.subr.mxu0 0.0
        %645 = vmatpush2.msra.mxu0 0.0
        %646 = vmatprep.subr.mxu0 0.0
        %647 = vmatpush2.msra.mxu0 0.0
        %648 = vmatprep.subr.mxu0 0.0
        %649 = vmatpush2.msra.mxu0 0.0
        %650 = vmatprep.subr.mxu0 0.0
        %651 = vmatpush2.msra.mxu0 0.0
        %652 = vmatprep.subr.mxu0 0.0
        %653 = vmatpush2.msra.mxu0 0.0
        %654 = vmatprep.subr.mxu0 0.0
        %655 = vmatpush2.msra.mxu0 0.0
        %656 = vmatprep.subr.mxu0 0.0
        %657 = vmatpush2.msra.mxu0 0.0
        %658 = vmatprep.subr.mxu0 0.0
        %659 = vmatpush2.msra.mxu0 0.0
        %660 = vmatprep.subr.mxu0 0.0
        %661 = vmatpush2.msra.mxu0 0.0
        %662 = vmatprep.subr.mxu0 0.0
        %663 = vmatpush2.msra.mxu0 0.0
        %664 = vmatprep.mubr.f32.mxu0 0.0
        %665 = vmatmul.mubr.f32.gmra.mxu0 %v458
        %v666 = vpop.f32.mrf.mxu0
        %v667 = vadd.f32 0.0, %v666
        %v668 = vpop.f32.mrf.mxu0
        %669 = vdwg.mxu0
        %670 = vmatprep.subr.mxu0 0.0
        %671 = vmatpush1.msra.mxu0 0.0
        %672 = vmatprep.subr.mxu0 0.0
        %673 = vmatpush1.msra.mxu0 0.0
        %674 = vmatprep.subr.mxu0 0.0
        %675 = vmatpush1.msra.mxu0 0.0
        %676 = vmatprep.subr.mxu0 0.0
        %677 = vmatpush1.msra.mxu0 0.0
        %678 = vmatprep.subr.mxu0 0.0
        %679 = vmatpush1.msra.mxu0 0.0
        %680 = vmatprep.subr.mxu0 0.0
        %681 = vmatpush1.msra.mxu0 0.0
        %682 = vmatprep.subr.mxu0 0.0
        %683 = vmatpush1.msra.mxu0 0.0
        %684 = vmatprep.subr.mxu0 0.0
        %685 = vmatpush1.msra.mxu0 0.0
        %686 = vmatprep.subr.mxu0 0.0
        %687 = vmatpush1.msra.mxu0 0.0
        %688 = vmatprep.subr.mxu0 0.0
        %689 = vmatpush1.msra.mxu0 0.0
        %690 = vmatprep.subr.mxu0 0.0
        %691 = vmatpush1.msra.mxu0 0.0
        %692 = vmatprep.subr.mxu0 0.0
        %693 = vmatpush1.msra.mxu0 0.0
        %694 = vmatprep.subr.mxu0 0.0
        %695 = vmatpush1.msra.mxu0 0.0
        %696 = vmatprep.subr.mxu0 0.0
        %697 = vmatpush1.msra.mxu0 0.0
        %698 = vmatprep.subr.mxu0 0.0
        %699 = vmatpush1.msra.mxu0 0.0
        %700 = vmatprep.subr.mxu0 0.0
        %701 = vmatpush1.msra.mxu0 %v452
        %702 = vmatprep.subr.mxu0 0.0
        %703 = vmatpush2.msra.mxu0 0.0
        %704 = vmatprep.subr.mxu0 0.0
        %705 = vmatpush2.msra.mxu0 0.0
        %706 = vmatprep.subr.mxu0 0.0
        %707 = vmatpush2.msra.mxu0 0.0
        %708 = vmatprep.subr.mxu0 0.0
        %709 = vmatpush2.msra.mxu0 0.0
        %710 = vmatprep.subr.mxu0 0.0
        %711 = vmatpush2.msra.mxu0 0.0
        %712 = vmatprep.subr.mxu0 0.0
        %713 = vmatpush2.msra.mxu0 0.0
        %714 = vmatprep.subr.mxu0 0.0
        %715 = vmatpush2.msra.mxu0 0.0
        %716 = vmatprep.subr.mxu0 0.0
        %717 = vmatpush2.msra.mxu0 0.0
        %718 = vmatprep.subr.mxu0 0.0
        %719 = vmatpush2.msra.mxu0 0.0
        %720 = vmatprep.subr.mxu0 0.0
        %721 = vmatpush2.msra.mxu0 0.0
        %722 = vmatprep.subr.mxu0 0.0
        %723 = vmatpush2.msra.mxu0 0.0
        %724 = vmatprep.subr.mxu0 0.0
        %725 = vmatpush2.msra.mxu0 0.0
        %726 = vmatprep.subr.mxu0 0.0
        %727 = vmatpush2.msra.mxu0 0.0
        %728 = vmatprep.subr.mxu0 0.0
        %729 = vmatpush2.msra.mxu0 0.0
        %730 = vmatprep.subr.mxu0 0.0
        %731 = vmatpush2.msra.mxu0 0.0
        %732 = vmatprep.subr.mxu0 0.0
        %733 = vmatpush2.msra.mxu0 0.0
        %734 = vmatprep.mubr.f32.mxu0 0.0
        %735 = vmatmul.mubr.f32.gmra.mxu0 %v458
        %v736 = vpop.f32.mrf.mxu0
        %v737 = vadd.f32 0.0, %v736
        %v738 = vpop.f32.mrf.mxu0
        %739 = vdwg.mxu0
        %v740 = vadd.f32 %v453, %v527
        %v741 = vadd.f32 %v454, %v597
        %v742 = vadd.f32 %v455, %v667
        %v743 = vadd.f32 %v456, %v737
        %vm744 = vcmask 130048
        %745 = vst.msk [vmem:[#allocation3] sm:$0xff] %vm744, %v740
        %746 = vst.msk [vmem:[#allocation3 + $0x8] sm:$0xff] %vm744, %v741
        %747 = vst.msk [vmem:[#allocation3 + $0x10] sm:$0xff] %vm744, %v742
        %748 = vst.msk [vmem:[#allocation3 + $0x18] sm:$0xff] %vm744, %v743
        %v749 = vld [vmem:[#allocation2] sm:$0xff]
        %v750 = vld [vmem:[#allocation2 + $0x8] sm:$0xff]
        %v751 = vld [vmem:[#allocation2 + $0x10] sm:$0xff]
        %v752 = vld [vmem:[#allocation2 + $0x18] sm:$0xff]
        %v753 = vld [vmem:[#allocation2 + $0x20] sm:$0xff]
        %v754 = vld [vmem:[#allocation2 + $0x28] sm:$0xff]
        %v755 = vld [vmem:[#allocation2 + $0x30] sm:$0xff]
        %v756 = vld [vmem:[#allocation2 + $0x38] sm:$0xff]
        %v757 = vld [vmem:[%s331] sm:$0xff]
        %v758 = vld [vmem:[%s331 + $0x8] sm:$0xff]
        %v759 = vld [vmem:[%s331 + $0x10] sm:$0xff]
        %v760 = vld [vmem:[%s331 + $0x18] sm:$0xff]
        %761 = vxpose.xlu0.b32.start [1/16] %v449, 128
        %762 = vxpose.xlu0.b32.cont [2/16] 0.0, 128
        %763 = vxpose.xlu0.b32.cont [3/16] 0.0, 128
        %764 = vxpose.xlu0.b32.cont [4/16] 0.0, 128
        %765 = vxpose.xlu0.b32.cont [5/16] 0.0, 128
        %766 = vxpose.xlu0.b32.cont [6/16] 0.0, 128
        %767 = vxpose.xlu0.b32.cont [7/16] 0.0, 128
        %768 = vxpose.xlu0.b32.cont [8/16] 0.0, 128
        %769 = vxpose.xlu0.b32.cont [9/16] 0.0, 128
        %770 = vxpose.xlu0.b32.cont [10/16] 0.0, 128
        %771 = vxpose.xlu0.b32.cont [11/16] 0.0, 128
        %772 = vxpose.xlu0.b32.cont [12/16] 0.0, 128
        %773 = vxpose.xlu0.b32.cont [13/16] 0.0, 128
        %774 = vxpose.xlu0.b32.cont [14/16] 0.0, 128
        %775 = vxpose.xlu0.b32.cont [15/16] 0.0, 128
        %776 = vxpose.xlu0.b32.end [16/16] 0.0, 128
        %v777 = vpop.trf.xlu0
        %v778 = vpop.trf.xlu0
        %v779 = vpop.trf.xlu0
        %v780 = vpop.trf.xlu0
        %v781 = vpop.trf.xlu0
        %v782 = vpop.trf.xlu0
        %v783 = vpop.trf.xlu0
        %v784 = vpop.trf.xlu0
        %v785 = vpop.trf.xlu0
        %v786 = vpop.trf.xlu0
        %v787 = vpop.trf.xlu0
        %v788 = vpop.trf.xlu0
        %v789 = vpop.trf.xlu0
        %v790 = vpop.trf.xlu0
        %v791 = vpop.trf.xlu0
        %v792 = vpop.trf.xlu0
        %v794 = vsel %vm448, %v777, 0
        %v797 = vsel %vm448, %v778, 0
        %799 = vmatprep.subr.mxu0 0.0
        %800 = vmatpush1.msra.mxu0 0.0
        %801 = vmatprep.subr.mxu0 0.0
        %802 = vmatpush1.msra.mxu0 0.0
        %803 = vmatprep.subr.mxu0 0.0
        %804 = vmatpush1.msra.mxu0 0.0
        %805 = vmatprep.subr.mxu0 0.0
        %806 = vmatpush1.msra.mxu0 0.0
        %807 = vmatprep.subr.mxu0 0.0
        %808 = vmatpush1.msra.mxu0 0.0
        %809 = vmatprep.subr.mxu0 0.0
        %810 = vmatpush1.msra.mxu0 0.0
        %811 = vmatprep.subr.mxu0 0.0
        %812 = vmatpush1.msra.mxu0 0.0
        %813 = vmatprep.subr.mxu0 0.0
        %814 = vmatpush1.msra.mxu0 0.0
        %815 = vmatprep.subr.mxu0 0.0
        %816 = vmatpush1.msra.mxu0 0.0
        %817 = vmatprep.subr.mxu0 0.0
        %818 = vmatpush1.msra.mxu0 0.0
        %819 = vmatprep.subr.mxu0 0.0
        %820 = vmatpush1.msra.mxu0 0.0
        %821 = vmatprep.subr.mxu0 0.0
        %822 = vmatpush1.msra.mxu0 0.0
        %823 = vmatprep.subr.mxu0 0.0
        %824 = vmatpush1.msra.mxu0 0.0
        %825 = vmatprep.subr.mxu0 0.0
        %826 = vmatpush1.msra.mxu0 0.0
        %827 = vmatprep.subr.mxu0 0.0
        %828 = vmatpush1.msra.mxu0 0.0
        %829 = vmatprep.subr.mxu0 0.0
        %830 = vmatpush1.msra.mxu0 %v757
        %831 = vmatprep.subr.mxu0 0.0
        %832 = vmatpush2.msra.mxu0 0.0
        %833 = vmatprep.subr.mxu0 0.0
        %834 = vmatpush2.msra.mxu0 0.0
        %835 = vmatprep.subr.mxu0 0.0
        %836 = vmatpush2.msra.mxu0 0.0
        %837 = vmatprep.subr.mxu0 0.0
        %838 = vmatpush2.msra.mxu0 0.0
        %839 = vmatprep.subr.mxu0 0.0
        %840 = vmatpush2.msra.mxu0 0.0
        %841 = vmatprep.subr.mxu0 0.0
        %842 = vmatpush2.msra.mxu0 0.0
        %843 = vmatprep.subr.mxu0 0.0
        %844 = vmatpush2.msra.mxu0 0.0
        %845 = vmatprep.subr.mxu0 0.0
        %846 = vmatpush2.msra.mxu0 0.0
        %847 = vmatprep.subr.mxu0 0.0
        %848 = vmatpush2.msra.mxu0 0.0
        %849 = vmatprep.subr.mxu0 0.0
        %850 = vmatpush2.msra.mxu0 0.0
        %851 = vmatprep.subr.mxu0 0.0
        %852 = vmatpush2.msra.mxu0 0.0
        %853 = vmatprep.subr.mxu0 0.0
        %854 = vmatpush2.msra.mxu0 0.0
        %855 = vmatprep.subr.mxu0 0.0
        %856 = vmatpush2.msra.mxu0 0.0
        %857 = vmatprep.subr.mxu0 0.0
        %858 = vmatpush2.msra.mxu0 0.0
        %859 = vmatprep.subr.mxu0 0.0
        %860 = vmatpush2.msra.mxu0 0.0
        %861 = vmatprep.subr.mxu0 0.0
        %862 = vmatpush2.msra.mxu0 0.0
        %863 = vmatprep.mubr.f32.mxu0 0.0
        %864 = vmatmul.mubr.f32.gmra.mxu0 %v794
        %v865 = vpop.f32.mrf.mxu0
        %v866 = vadd.f32 0.0, %v865
        %v867 = vpop.f32.mrf.mxu0
        %868 = vmatprep.mubr.f32.mxu0 0.0
        %869 = vmatmul.mubr.f32.gmra.mxu0 %v797
        %v870 = vpop.f32.mrf.mxu0
        %v871 = vadd.f32 0.0, %v870
        %v872 = vpop.f32.mrf.mxu0
        %873 = vdwg.mxu0
        %874 = vxpose.xlu0.b32.start [1/16] %v450, 128
        %875 = vxpose.xlu0.b32.cont [2/16] 0.0, 128
        %876 = vxpose.xlu0.b32.cont [3/16] 0.0, 128
        %877 = vxpose.xlu0.b32.cont [4/16] 0.0, 128
        %878 = vxpose.xlu0.b32.cont [5/16] 0.0, 128
        %879 = vxpose.xlu0.b32.cont [6/16] 0.0, 128
        %880 = vxpose.xlu0.b32.cont [7/16] 0.0, 128
        %881 = vxpose.xlu0.b32.cont [8/16] 0.0, 128
        %882 = vxpose.xlu0.b32.cont [9/16] 0.0, 128
        %883 = vxpose.xlu0.b32.cont [10/16] 0.0, 128
        %884 = vxpose.xlu0.b32.cont [11/16] 0.0, 128
        %885 = vxpose.xlu0.b32.cont [12/16] 0.0, 128
        %886 = vxpose.xlu0.b32.cont [13/16] 0.0, 128
        %887 = vxpose.xlu0.b32.cont [14/16] 0.0, 128
        %888 = vxpose.xlu0.b32.cont [15/16] 0.0, 128
        %889 = vxpose.xlu0.b32.end [16/16] 0.0, 128
        %v890 = vpop.trf.xlu0
        %v891 = vpop.trf.xlu0
        %v892 = vpop.trf.xlu0
        %v893 = vpop.trf.xlu0
        %v894 = vpop.trf.xlu0
        %v895 = vpop.trf.xlu0
        %v896 = vpop.trf.xlu0
        %v897 = vpop.trf.xlu0
        %v898 = vpop.trf.xlu0
        %v899 = vpop.trf.xlu0
        %v900 = vpop.trf.xlu0
        %v901 = vpop.trf.xlu0
        %v902 = vpop.trf.xlu0
        %v903 = vpop.trf.xlu0
        %v904 = vpop.trf.xlu0
        %v905 = vpop.trf.xlu0
        %v907 = vsel %vm448, %v890, 0
        %v910 = vsel %vm448, %v891, 0
        %912 = vmatprep.subr.mxu0 0.0
        %913 = vmatpush1.msra.mxu0 0.0
        %914 = vmatprep.subr.mxu0 0.0
        %915 = vmatpush1.msra.mxu0 0.0
        %916 = vmatprep.subr.mxu0 0.0
        %917 = vmatpush1.msra.mxu0 0.0
        %918 = vmatprep.subr.mxu0 0.0
        %919 = vmatpush1.msra.mxu0 0.0
        %920 = vmatprep.subr.mxu0 0.0
        %921 = vmatpush1.msra.mxu0 0.0
        %922 = vmatprep.subr.mxu0 0.0
        %923 = vmatpush1.msra.mxu0 0.0
        %924 = vmatprep.subr.mxu0 0.0
        %925 = vmatpush1.msra.mxu0 0.0
        %926 = vmatprep.subr.mxu0 0.0
        %927 = vmatpush1.msra.mxu0 0.0
        %928 = vmatprep.subr.mxu0 0.0
        %929 = vmatpush1.msra.mxu0 0.0
        %930 = vmatprep.subr.mxu0 0.0
        %931 = vmatpush1.msra.mxu0 0.0
        %932 = vmatprep.subr.mxu0 0.0
        %933 = vmatpush1.msra.mxu0 0.0
        %934 = vmatprep.subr.mxu0 0.0
        %935 = vmatpush1.msra.mxu0 0.0
        %936 = vmatprep.subr.mxu0 0.0
        %937 = vmatpush1.msra.mxu0 0.0
        %938 = vmatprep.subr.mxu0 0.0
        %939 = vmatpush1.msra.mxu0 0.0
        %940 = vmatprep.subr.mxu0 0.0
        %941 = vmatpush1.msra.mxu0 0.0
        %942 = vmatprep.subr.mxu0 0.0
        %943 = vmatpush1.msra.mxu0 %v758
        %944 = vmatprep.subr.mxu0 0.0
        %945 = vmatpush2.msra.mxu0 0.0
        %946 = vmatprep.subr.mxu0 0.0
        %947 = vmatpush2.msra.mxu0 0.0
        %948 = vmatprep.subr.mxu0 0.0
        %949 = vmatpush2.msra.mxu0 0.0
        %950 = vmatprep.subr.mxu0 0.0
        %951 = vmatpush2.msra.mxu0 0.0
        %952 = vmatprep.subr.mxu0 0.0
        %953 = vmatpush2.msra.mxu0 0.0
        %954 = vmatprep.subr.mxu0 0.0
        %955 = vmatpush2.msra.mxu0 0.0
        %956 = vmatprep.subr.mxu0 0.0
        %957 = vmatpush2.msra.mxu0 0.0
        %958 = vmatprep.subr.mxu0 0.0
        %959 = vmatpush2.msra.mxu0 0.0
        %960 = vmatprep.subr.mxu0 0.0
        %961 = vmatpush2.msra.mxu0 0.0
        %962 = vmatprep.subr.mxu0 0.0
        %963 = vmatpush2.msra.mxu0 0.0
        %964 = vmatprep.subr.mxu0 0.0
        %965 = vmatpush2.msra.mxu0 0.0
        %966 = vmatprep.subr.mxu0 0.0
        %967 = vmatpush2.msra.mxu0 0.0
        %968 = vmatprep.subr.mxu0 0.0
        %969 = vmatpush2.msra.mxu0 0.0
        %970 = vmatprep.subr.mxu0 0.0
        %971 = vmatpush2.msra.mxu0 0.0
        %972 = vmatprep.subr.mxu0 0.0
        %973 = vmatpush2.msra.mxu0 0.0
        %974 = vmatprep.subr.mxu0 0.0
        %975 = vmatpush2.msra.mxu0 0.0
        %976 = vmatprep.mubr.f32.mxu0 0.0
        %977 = vmatmul.mubr.f32.gmra.mxu0 %v907
        %v978 = vpop.f32.mrf.mxu0
        %v979 = vadd.f32 0.0, %v978
        %v980 = vpop.f32.mrf.mxu0
        %981 = vmatprep.mubr.f32.mxu0 0.0
        %982 = vmatmul.mubr.f32.gmra.mxu0 %v910
        %v983 = vpop.f32.mrf.mxu0
        %v984 = vadd.f32 0.0, %v983
        %v985 = vpop.f32.mrf.mxu0
        %986 = vdwg.mxu0
        %987 = vxpose.xlu0.b32.start [1/16] %v451, 128
        %988 = vxpose.xlu0.b32.cont [2/16] 0.0, 128
        %989 = vxpose.xlu0.b32.cont [3/16] 0.0, 128
        %990 = vxpose.xlu0.b32.cont [4/16] 0.0, 128
        %991 = vxpose.xlu0.b32.cont [5/16] 0.0, 128
        %992 = vxpose.xlu0.b32.cont [6/16] 0.0, 128
        %993 = vxpose.xlu0.b32.cont [7/16] 0.0, 128
        %994 = vxpose.xlu0.b32.cont [8/16] 0.0, 128
        %995 = vxpose.xlu0.b32.cont [9/16] 0.0, 128
        %996 = vxpose.xlu0.b32.cont [10/16] 0.0, 128
        %997 = vxpose.xlu0.b32.cont [11/16] 0.0, 128
        %998 = vxpose.xlu0.b32.cont [12/16] 0.0, 128
        %999 = vxpose.xlu0.b32.cont [13/16] 0.0, 128
        %1000 = vxpose.xlu0.b32.cont [14/16] 0.0, 128
        %1001 = vxpose.xlu0.b32.cont [15/16] 0.0, 128
        %1002 = vxpose.xlu0.b32.end [16/16] 0.0, 128
        %v1003 = vpop.trf.xlu0
        %v1004 = vpop.trf.xlu0
        %v1005 = vpop.trf.xlu0
        %v1006 = vpop.trf.xlu0
        %v1007 = vpop.trf.xlu0
        %v1008 = vpop.trf.xlu0
        %v1009 = vpop.trf.xlu0
        %v1010 = vpop.trf.xlu0
        %v1011 = vpop.trf.xlu0
        %v1012 = vpop.trf.xlu0
        %v1013 = vpop.trf.xlu0
        %v1014 = vpop.trf.xlu0
        %v1015 = vpop.trf.xlu0
        %v1016 = vpop.trf.xlu0
        %v1017 = vpop.trf.xlu0
        %v1018 = vpop.trf.xlu0
        %v1020 = vsel %vm448, %v1003, 0
        %v1023 = vsel %vm448, %v1004, 0
        %1025 = vmatprep.subr.mxu0 0.0
        %1026 = vmatpush1.msra.mxu0 0.0
        %1027 = vmatprep.subr.mxu0 0.0
        %1028 = vmatpush1.msra.mxu0 0.0
        %1029 = vmatprep.subr.mxu0 0.0
        %1030 = vmatpush1.msra.mxu0 0.0
        %1031 = vmatprep.subr.mxu0 0.0
        %1032 = vmatpush1.msra.mxu0 0.0
        %1033 = vmatprep.subr.mxu0 0.0
        %1034 = vmatpush1.msra.mxu0 0.0
        %1035 = vmatprep.subr.mxu0 0.0
        %1036 = vmatpush1.msra.mxu0 0.0
        %1037 = vmatprep.subr.mxu0 0.0
        %1038 = vmatpush1.msra.mxu0 0.0
        %1039 = vmatprep.subr.mxu0 0.0
        %1040 = vmatpush1.msra.mxu0 0.0
        %1041 = vmatprep.subr.mxu0 0.0
        %1042 = vmatpush1.msra.mxu0 0.0
        %1043 = vmatprep.subr.mxu0 0.0
        %1044 = vmatpush1.msra.mxu0 0.0
        %1045 = vmatprep.subr.mxu0 0.0
        %1046 = vmatpush1.msra.mxu0 0.0
        %1047 = vmatprep.subr.mxu0 0.0
        %1048 = vmatpush1.msra.mxu0 0.0
        %1049 = vmatprep.subr.mxu0 0.0
        %1050 = vmatpush1.msra.mxu0 0.0
        %1051 = vmatprep.subr.mxu0 0.0
        %1052 = vmatpush1.msra.mxu0 0.0
        %1053 = vmatprep.subr.mxu0 0.0
        %1054 = vmatpush1.msra.mxu0 0.0
        %1055 = vmatprep.subr.mxu0 0.0
        %1056 = vmatpush1.msra.mxu0 %v759
        %1057 = vmatprep.subr.mxu0 0.0
        %1058 = vmatpush2.msra.mxu0 0.0
        %1059 = vmatprep.subr.mxu0 0.0
        %1060 = vmatpush2.msra.mxu0 0.0
        %1061 = vmatprep.subr.mxu0 0.0
        %1062 = vmatpush2.msra.mxu0 0.0
        %1063 = vmatprep.subr.mxu0 0.0
        %1064 = vmatpush2.msra.mxu0 0.0
        %1065 = vmatprep.subr.mxu0 0.0
        %1066 = vmatpush2.msra.mxu0 0.0
        %1067 = vmatprep.subr.mxu0 0.0
        %1068 = vmatpush2.msra.mxu0 0.0
        %1069 = vmatprep.subr.mxu0 0.0
        %1070 = vmatpush2.msra.mxu0 0.0
        %1071 = vmatprep.subr.mxu0 0.0
        %1072 = vmatpush2.msra.mxu0 0.0
        %1073 = vmatprep.subr.mxu0 0.0
        %1074 = vmatpush2.msra.mxu0 0.0
        %1075 = vmatprep.subr.mxu0 0.0
        %1076 = vmatpush2.msra.mxu0 0.0
        %1077 = vmatprep.subr.mxu0 0.0
        %1078 = vmatpush2.msra.mxu0 0.0
        %1079 = vmatprep.subr.mxu0 0.0
        %1080 = vmatpush2.msra.mxu0 0.0
        %1081 = vmatprep.subr.mxu0 0.0
        %1082 = vmatpush2.msra.mxu0 0.0
        %1083 = vmatprep.subr.mxu0 0.0
        %1084 = vmatpush2.msra.mxu0 0.0
        %1085 = vmatprep.subr.mxu0 0.0
        %1086 = vmatpush2.msra.mxu0 0.0
        %1087 = vmatprep.subr.mxu0 0.0
        %1088 = vmatpush2.msra.mxu0 0.0
        %1089 = vmatprep.mubr.f32.mxu0 0.0
        %1090 = vmatmul.mubr.f32.gmra.mxu0 %v1020
        %v1091 = vpop.f32.mrf.mxu0
        %v1092 = vadd.f32 0.0, %v1091
        %v1093 = vpop.f32.mrf.mxu0
        %1094 = vmatprep.mubr.f32.mxu0 0.0
        %1095 = vmatmul.mubr.f32.gmra.mxu0 %v1023
        %v1096 = vpop.f32.mrf.mxu0
        %v1097 = vadd.f32 0.0, %v1096
        %v1098 = vpop.f32.mrf.mxu0
        %1099 = vdwg.mxu0
        %1100 = vxpose.xlu0.b32.start [1/16] %v452, 128
        %1101 = vxpose.xlu0.b32.cont [2/16] 0.0, 128
        %1102 = vxpose.xlu0.b32.cont [3/16] 0.0, 128
        %1103 = vxpose.xlu0.b32.cont [4/16] 0.0, 128
        %1104 = vxpose.xlu0.b32.cont [5/16] 0.0, 128
        %1105 = vxpose.xlu0.b32.cont [6/16] 0.0, 128
        %1106 = vxpose.xlu0.b32.cont [7/16] 0.0, 128
        %1107 = vxpose.xlu0.b32.cont [8/16] 0.0, 128
        %1108 = vxpose.xlu0.b32.cont [9/16] 0.0, 128
        %1109 = vxpose.xlu0.b32.cont [10/16] 0.0, 128
        %1110 = vxpose.xlu0.b32.cont [11/16] 0.0, 128
        %1111 = vxpose.xlu0.b32.cont [12/16] 0.0, 128
        %1112 = vxpose.xlu0.b32.cont [13/16] 0.0, 128
        %1113 = vxpose.xlu0.b32.cont [14/16] 0.0, 128
        %1114 = vxpose.xlu0.b32.cont [15/16] 0.0, 128
        %1115 = vxpose.xlu0.b32.end [16/16] 0.0, 128
        %v1116 = vpop.trf.xlu0
        %v1117 = vpop.trf.xlu0
        %v1118 = vpop.trf.xlu0
        %v1119 = vpop.trf.xlu0
        %v1120 = vpop.trf.xlu0
        %v1121 = vpop.trf.xlu0
        %v1122 = vpop.trf.xlu0
        %v1123 = vpop.trf.xlu0
        %v1124 = vpop.trf.xlu0
        %v1125 = vpop.trf.xlu0
        %v1126 = vpop.trf.xlu0
        %v1127 = vpop.trf.xlu0
        %v1128 = vpop.trf.xlu0
        %v1129 = vpop.trf.xlu0
        %v1130 = vpop.trf.xlu0
        %v1131 = vpop.trf.xlu0
        %v1133 = vsel %vm448, %v1116, 0
        %v1136 = vsel %vm448, %v1117, 0
        %1138 = vmatprep.subr.mxu0 0.0
        %1139 = vmatpush1.msra.mxu0 0.0
        %1140 = vmatprep.subr.mxu0 0.0
        %1141 = vmatpush1.msra.mxu0 0.0
        %1142 = vmatprep.subr.mxu0 0.0
        %1143 = vmatpush1.msra.mxu0 0.0
        %1144 = vmatprep.subr.mxu0 0.0
        %1145 = vmatpush1.msra.mxu0 0.0
        %1146 = vmatprep.subr.mxu0 0.0
        %1147 = vmatpush1.msra.mxu0 0.0
        %1148 = vmatprep.subr.mxu0 0.0
        %1149 = vmatpush1.msra.mxu0 0.0
        %1150 = vmatprep.subr.mxu0 0.0
        %1151 = vmatpush1.msra.mxu0 0.0
        %1152 = vmatprep.subr.mxu0 0.0
        %1153 = vmatpush1.msra.mxu0 0.0
        %1154 = vmatprep.subr.mxu0 0.0
        %1155 = vmatpush1.msra.mxu0 0.0
        %1156 = vmatprep.subr.mxu0 0.0
        %1157 = vmatpush1.msra.mxu0 0.0
        %1158 = vmatprep.subr.mxu0 0.0
        %1159 = vmatpush1.msra.mxu0 0.0
        %1160 = vmatprep.subr.mxu0 0.0
        %1161 = vmatpush1.msra.mxu0 0.0
        %1162 = vmatprep.subr.mxu0 0.0
        %1163 = vmatpush1.msra.mxu0 0.0
        %1164 = vmatprep.subr.mxu0 0.0
        %1165 = vmatpush1.msra.mxu0 0.0
        %1166 = vmatprep.subr.mxu0 0.0
        %1167 = vmatpush1.msra.mxu0 0.0
        %1168 = vmatprep.subr.mxu0 0.0
        %1169 = vmatpush1.msra.mxu0 %v760
        %1170 = vmatprep.subr.mxu0 0.0
        %1171 = vmatpush2.msra.mxu0 0.0
        %1172 = vmatprep.subr.mxu0 0.0
        %1173 = vmatpush2.msra.mxu0 0.0
        %1174 = vmatprep.subr.mxu0 0.0
        %1175 = vmatpush2.msra.mxu0 0.0
        %1176 = vmatprep.subr.mxu0 0.0
        %1177 = vmatpush2.msra.mxu0 0.0
        %1178 = vmatprep.subr.mxu0 0.0
        %1179 = vmatpush2.msra.mxu0 0.0
        %1180 = vmatprep.subr.mxu0 0.0
        %1181 = vmatpush2.msra.mxu0 0.0
        %1182 = vmatprep.subr.mxu0 0.0
        %1183 = vmatpush2.msra.mxu0 0.0
        %1184 = vmatprep.subr.mxu0 0.0
        %1185 = vmatpush2.msra.mxu0 0.0
        %1186 = vmatprep.subr.mxu0 0.0
        %1187 = vmatpush2.msra.mxu0 0.0
        %1188 = vmatprep.subr.mxu0 0.0
        %1189 = vmatpush2.msra.mxu0 0.0
        %1190 = vmatprep.subr.mxu0 0.0
        %1191 = vmatpush2.msra.mxu0 0.0
        %1192 = vmatprep.subr.mxu0 0.0
        %1193 = vmatpush2.msra.mxu0 0.0
        %1194 = vmatprep.subr.mxu0 0.0
        %1195 = vmatpush2.msra.mxu0 0.0
        %1196 = vmatprep.subr.mxu0 0.0
        %1197 = vmatpush2.msra.mxu0 0.0
        %1198 = vmatprep.subr.mxu0 0.0
        %1199 = vmatpush2.msra.mxu0 0.0
        %1200 = vmatprep.subr.mxu0 0.0
        %1201 = vmatpush2.msra.mxu0 0.0
        %1202 = vmatprep.mubr.f32.mxu0 0.0
        %1203 = vmatmul.mubr.f32.gmra.mxu0 %v1133
        %v1204 = vpop.f32.mrf.mxu0
        %v1205 = vadd.f32 0.0, %v1204
        %v1206 = vpop.f32.mrf.mxu0
        %1207 = vmatprep.mubr.f32.mxu0 0.0
        %1208 = vmatmul.mubr.f32.gmra.mxu0 %v1136
        %v1209 = vpop.f32.mrf.mxu0
        %v1210 = vadd.f32 0.0, %v1209
        %v1211 = vpop.f32.mrf.mxu0
        %1212 = vdwg.mxu0
        %v1213 = vadd.f32 %v749, %v866
        %v1214 = vadd.f32 %v750, %v871
        %v1215 = vadd.f32 %v751, %v979
        %v1216 = vadd.f32 %v752, %v984
        %v1217 = vadd.f32 %v753, %v1092
        %v1218 = vadd.f32 %v754, %v1097
        %v1219 = vadd.f32 %v755, %v1205
        %v1220 = vadd.f32 %v756, %v1210
        %1221 = vst.msk [vmem:[#allocation2] sm:$0xff] %vm448, %v1213
        %1222 = vst.msk [vmem:[#allocation2 + $0x8] sm:$0xff] %vm448, %v1214
        %1223 = vst.msk [vmem:[#allocation2 + $0x10] sm:$0xff] %vm448, %v1215
        %1224 = vst.msk [vmem:[#allocation2 + $0x18] sm:$0xff] %vm448, %v1216
        %1225 = vst.msk [vmem:[#allocation2 + $0x20] sm:$0xff] %vm448, %v1217
        %1226 = vst.msk [vmem:[#allocation2 + $0x28] sm:$0xff] %vm448, %v1218
        %1227 = vst.msk [vmem:[#allocation2 + $0x30] sm:$0xff] %vm448, %v1219
        %1228 = vst.msk [vmem:[#allocation2 + $0x38] sm:$0xff] %vm448, %v1220
        // Predicated region
        $region57: #{tpu_custom_call.1} parent=39 // pred_check
          %p1229 = pneg %p388
        $region58: #{tpu_custom_call.1} parent=39 // pred_check_branch
          %1231 = sbr.rel (%p1229) target = $region60
        $region59: #{tpu_custom_call.1} parent=39 // pred_region
          %v1232 = vld [vmem:[%s313] sm:$0xff]
          %v1233 = vld [vmem:[%s313 + $0x8] sm:$0xff]
          %v1234 = vld [vmem:[%s313 + $0x10] sm:$0xff]
          %v1235 = vld [vmem:[%s313 + $0x18] sm:$0xff]
          %v1236 = vmax.f32 %v1232, 0.0
          %v1237 = vmax.f32 %v1233, 0.0
          %v1238 = vmax.f32 %v1234, 0.0
          %v1239 = vmax.f32 %v1235, 0.0
          %v1240 = vld [vmem:[%s382] sm:$0xff]
          %1242 = vset.pattern.permute.xlu0 0
          %1243 = vperm.xlu0 %1242, %v1240
          %v1244 = vpop.permute.xlu0 %1243
          %v1246 = vmul.f32 %v1236, %v1244
          %v1247 = vmul.f32 %v1237, %v1244
          %v1248 = vmul.f32 %v1238, %v1244
          %v1249 = vmul.f32 %v1239, %v1244
          %1250 = vset.pattern.permute.xlu0 1
          %1251 = vperm.xlu0 %1250, %v1240
          %v1252 = vpop.permute.xlu0 %1251
          %v1254 = vmul.f32 %v1236, %v1252
          %v1255 = vmul.f32 %v1237, %v1252
          %v1256 = vmul.f32 %v1238, %v1252
          %v1257 = vmul.f32 %v1239, %v1252
          %1262 = vrot.lane.b32.xlu0 %v1254, 8
          %v1263 = vpop.permute.xlu0 %1262
          %1264 = vrot.lane.b32.xlu0 %v1255, 8
          %v1265 = vpop.permute.xlu0 %1264
          %1266 = vrot.lane.b32.xlu0 %v1256, 8
          %v1267 = vpop.permute.xlu0 %1266
          %1268 = vrot.lane.b32.xlu0 %v1257, 8
          %v1269 = vpop.permute.xlu0 %1268
          %v1274 = vsel %vm448, %v1246, %v1263
          %v1275 = vsel %vm448, %v1247, %v1265
          %v1276 = vsel %vm448, %v1248, %v1267
          %v1277 = vsel %vm448, %v1249, %v1269
          %v1278 = vld [vmem:[#allocation2] sm:$0xff]
          %v1279 = vld [vmem:[#allocation2 + $0x8] sm:$0xff]
          %v1280 = vld [vmem:[#allocation2 + $0x10] sm:$0xff]
          %v1281 = vld [vmem:[#allocation2 + $0x18] sm:$0xff]
          %v1282 = vld [vmem:[#allocation2 + $0x20] sm:$0xff]
          %v1283 = vld [vmem:[#allocation2 + $0x28] sm:$0xff]
          %v1284 = vld [vmem:[#allocation2 + $0x30] sm:$0xff]
          %v1285 = vld [vmem:[#allocation2 + $0x38] sm:$0xff]
          %v1287 = vsel %vm744, %v1274, 0
          %1289 = vmatprep.subr.mxu0 0.0
          %1290 = vmatpush1.msra.mxu0 0.0
          %1291 = vmatprep.subr.mxu0 0.0
          %1292 = vmatpush1.msra.mxu0 0.0
          %1293 = vmatprep.subr.mxu0 0.0
          %1294 = vmatpush1.msra.mxu0 0.0
          %1295 = vmatprep.subr.mxu0 0.0
          %1296 = vmatpush1.msra.mxu0 0.0
          %1297 = vmatprep.subr.mxu0 0.0
          %1298 = vmatpush1.msra.mxu0 0.0
          %1299 = vmatprep.subr.mxu0 0.0
          %1300 = vmatpush1.msra.mxu0 0.0
          %1301 = vmatprep.subr.mxu0 0.0
          %1302 = vmatpush1.msra.mxu0 0.0
          %1303 = vmatprep.subr.mxu0 0.0
          %1304 = vmatpush1.msra.mxu0 0.0
          %1305 = vmatprep.subr.mxu0 0.0
          %1306 = vmatpush1.msra.mxu0 0.0
          %1307 = vmatprep.subr.mxu0 0.0
          %1308 = vmatpush1.msra.mxu0 0.0
          %1309 = vmatprep.subr.mxu0 0.0
          %1310 = vmatpush1.msra.mxu0 0.0
          %1311 = vmatprep.subr.mxu0 0.0
          %1312 = vmatpush1.msra.mxu0 0.0
          %1313 = vmatprep.subr.mxu0 0.0
          %1314 = vmatpush1.msra.mxu0 0.0
          %1315 = vmatprep.subr.mxu0 0.0
          %1316 = vmatpush1.msra.mxu0 0.0
          %1317 = vmatprep.subr.mxu0 0.0
          %1318 = vmatpush1.msra.mxu0 %v1279
          %1319 = vmatprep.subr.mxu0 0.0
          %1320 = vmatpush1.msra.mxu0 %v1278
          %1321 = vmatprep.subr.mxu0 0.0
          %1322 = vmatpush2.msra.mxu0 0.0
          %1323 = vmatprep.subr.mxu0 0.0
          %1324 = vmatpush2.msra.mxu0 0.0
          %1325 = vmatprep.subr.mxu0 0.0
          %1326 = vmatpush2.msra.mxu0 0.0
          %1327 = vmatprep.subr.mxu0 0.0
          %1328 = vmatpush2.msra.mxu0 0.0
          %1329 = vmatprep.subr.mxu0 0.0
          %1330 = vmatpush2.msra.mxu0 0.0
          %1331 = vmatprep.subr.mxu0 0.0
          %1332 = vmatpush2.msra.mxu0 0.0
          %1333 = vmatprep.subr.mxu0 0.0
          %1334 = vmatpush2.msra.mxu0 0.0
          %1335 = vmatprep.subr.mxu0 0.0
          %1336 = vmatpush2.msra.mxu0 0.0
          %1337 = vmatprep.subr.mxu0 0.0
          %1338 = vmatpush2.msra.mxu0 0.0
          %1339 = vmatprep.subr.mxu0 0.0
          %1340 = vmatpush2.msra.mxu0 0.0
          %1341 = vmatprep.subr.mxu0 0.0
          %1342 = vmatpush2.msra.mxu0 0.0
          %1343 = vmatprep.subr.mxu0 0.0
          %1344 = vmatpush2.msra.mxu0 0.0
          %1345 = vmatprep.subr.mxu0 0.0
          %1346 = vmatpush2.msra.mxu0 0.0
          %1347 = vmatprep.subr.mxu0 0.0
          %1348 = vmatpush2.msra.mxu0 0.0
          %1349 = vmatprep.subr.mxu0 0.0
          %1350 = vmatpush2.msra.mxu0 0.0
          %1351 = vmatprep.subr.mxu0 0.0
          %1352 = vmatpush2.msra.mxu0 0.0
          %1353 = vmatprep.mubr.f32.mxu0 0.0
          %1354 = vmatmul.mubr.f32.gmra.mxu0 %v1287
          %v1355 = vpop.f32.mrf.mxu0
          %v1356 = vadd.f32 0.0, %v1355
          %v1357 = vpop.f32.mrf.mxu0
          %1358 = vdwg.mxu0
          %v1360 = vsel %vm744, %v1275, 0
          %1362 = vmatprep.subr.mxu0 0.0
          %1363 = vmatpush1.msra.mxu0 0.0
          %1364 = vmatprep.subr.mxu0 0.0
          %1365 = vmatpush1.msra.mxu0 0.0
          %1366 = vmatprep.subr.mxu0 0.0
          %1367 = vmatpush1.msra.mxu0 0.0
          %1368 = vmatprep.subr.mxu0 0.0
          %1369 = vmatpush1.msra.mxu0 0.0
          %1370 = vmatprep.subr.mxu0 0.0
          %1371 = vmatpush1.msra.mxu0 0.0
          %1372 = vmatprep.subr.mxu0 0.0
          %1373 = vmatpush1.msra.mxu0 0.0
          %1374 = vmatprep.subr.mxu0 0.0
          %1375 = vmatpush1.msra.mxu0 0.0
          %1376 = vmatprep.subr.mxu0 0.0
          %1377 = vmatpush1.msra.mxu0 0.0
          %1378 = vmatprep.subr.mxu0 0.0
          %1379 = vmatpush1.msra.mxu0 0.0
          %1380 = vmatprep.subr.mxu0 0.0
          %1381 = vmatpush1.msra.mxu0 0.0
          %1382 = vmatprep.subr.mxu0 0.0
          %1383 = vmatpush1.msra.mxu0 0.0
          %1384 = vmatprep.subr.mxu0 0.0
          %1385 = vmatpush1.msra.mxu0 0.0
          %1386 = vmatprep.subr.mxu0 0.0
          %1387 = vmatpush1.msra.mxu0 0.0
          %1388 = vmatprep.subr.mxu0 0.0
          %1389 = vmatpush1.msra.mxu0 0.0
          %1390 = vmatprep.subr.mxu0 0.0
          %1391 = vmatpush1.msra.mxu0 %v1281
          %1392 = vmatprep.subr.mxu0 0.0
          %1393 = vmatpush1.msra.mxu0 %v1280
          %1394 = vmatprep.subr.mxu0 0.0
          %1395 = vmatpush2.msra.mxu0 0.0
          %1396 = vmatprep.subr.mxu0 0.0
          %1397 = vmatpush2.msra.mxu0 0.0
          %1398 = vmatprep.subr.mxu0 0.0
          %1399 = vmatpush2.msra.mxu0 0.0
          %1400 = vmatprep.subr.mxu0 0.0
          %1401 = vmatpush2.msra.mxu0 0.0
          %1402 = vmatprep.subr.mxu0 0.0
          %1403 = vmatpush2.msra.mxu0 0.0
          %1404 = vmatprep.subr.mxu0 0.0
          %1405 = vmatpush2.msra.mxu0 0.0
          %1406 = vmatprep.subr.mxu0 0.0
          %1407 = vmatpush2.msra.mxu0 0.0
          %1408 = vmatprep.subr.mxu0 0.0
          %1409 = vmatpush2.msra.mxu0 0.0
          %1410 = vmatprep.subr.mxu0 0.0
          %1411 = vmatpush2.msra.mxu0 0.0
          %1412 = vmatprep.subr.mxu0 0.0
          %1413 = vmatpush2.msra.mxu0 0.0
          %1414 = vmatprep.subr.mxu0 0.0
          %1415 = vmatpush2.msra.mxu0 0.0
          %1416 = vmatprep.subr.mxu0 0.0
          %1417 = vmatpush2.msra.mxu0 0.0
          %1418 = vmatprep.subr.mxu0 0.0
          %1419 = vmatpush2.msra.mxu0 0.0
          %1420 = vmatprep.subr.mxu0 0.0
          %1421 = vmatpush2.msra.mxu0 0.0
          %1422 = vmatprep.subr.mxu0 0.0
          %1423 = vmatpush2.msra.mxu0 0.0
          %1424 = vmatprep.subr.mxu0 0.0
          %1425 = vmatpush2.msra.mxu0 0.0
          %1426 = vmatprep.mubr.f32.mxu0 0.0
          %1427 = vmatmul.mubr.f32.gmra.mxu0 %v1360
          %v1428 = vpop.f32.mrf.mxu0
          %v1429 = vadd.f32 0.0, %v1428
          %v1430 = vpop.f32.mrf.mxu0
          %1431 = vdwg.mxu0
          %v1433 = vsel %vm744, %v1276, 0
          %1435 = vmatprep.subr.mxu0 0.0
          %1436 = vmatpush1.msra.mxu0 0.0
          %1437 = vmatprep.subr.mxu0 0.0
          %1438 = vmatpush1.msra.mxu0 0.0
          %1439 = vmatprep.subr.mxu0 0.0
          %1440 = vmatpush1.msra.mxu0 0.0
          %1441 = vmatprep.subr.mxu0 0.0
          %1442 = vmatpush1.msra.mxu0 0.0
          %1443 = vmatprep.subr.mxu0 0.0
          %1444 = vmatpush1.msra.mxu0 0.0
          %1445 = vmatprep.subr.mxu0 0.0
          %1446 = vmatpush1.msra.mxu0 0.0
          %1447 = vmatprep.subr.mxu0 0.0
          %1448 = vmatpush1.msra.mxu0 0.0
          %1449 = vmatprep.subr.mxu0 0.0
          %1450 = vmatpush1.msra.mxu0 0.0
          %1451 = vmatprep.subr.mxu0 0.0
          %1452 = vmatpush1.msra.mxu0 0.0
          %1453 = vmatprep.subr.mxu0 0.0
          %1454 = vmatpush1.msra.mxu0 0.0
          %1455 = vmatprep.subr.mxu0 0.0
          %1456 = vmatpush1.msra.mxu0 0.0
          %1457 = vmatprep.subr.mxu0 0.0
          %1458 = vmatpush1.msra.mxu0 0.0
          %1459 = vmatprep.subr.mxu0 0.0
          %1460 = vmatpush1.msra.mxu0 0.0
          %1461 = vmatprep.subr.mxu0 0.0
          %1462 = vmatpush1.msra.mxu0 0.0
          %1463 = vmatprep.subr.mxu0 0.0
          %1464 = vmatpush1.msra.mxu0 %v1283
          %1465 = vmatprep.subr.mxu0 0.0
          %1466 = vmatpush1.msra.mxu0 %v1282
          %1467 = vmatprep.subr.mxu0 0.0
          %1468 = vmatpush2.msra.mxu0 0.0
          %1469 = vmatprep.subr.mxu0 0.0
          %1470 = vmatpush2.msra.mxu0 0.0
          %1471 = vmatprep.subr.mxu0 0.0
          %1472 = vmatpush2.msra.mxu0 0.0
          %1473 = vmatprep.subr.mxu0 0.0
          %1474 = vmatpush2.msra.mxu0 0.0
          %1475 = vmatprep.subr.mxu0 0.0
          %1476 = vmatpush2.msra.mxu0 0.0
          %1477 = vmatprep.subr.mxu0 0.0
          %1478 = vmatpush2.msra.mxu0 0.0
          %1479 = vmatprep.subr.mxu0 0.0
          %1480 = vmatpush2.msra.mxu0 0.0
          %1481 = vmatprep.subr.mxu0 0.0
          %1482 = vmatpush2.msra.mxu0 0.0
          %1483 = vmatprep.subr.mxu0 0.0
          %1484 = vmatpush2.msra.mxu0 0.0
          %1485 = vmatprep.subr.mxu0 0.0
          %1486 = vmatpush2.msra.mxu0 0.0
          %1487 = vmatprep.subr.mxu0 0.0
          %1488 = vmatpush2.msra.mxu0 0.0
          %1489 = vmatprep.subr.mxu0 0.0
          %1490 = vmatpush2.msra.mxu0 0.0
          %1491 = vmatprep.subr.mxu0 0.0
          %1492 = vmatpush2.msra.mxu0 0.0
          %1493 = vmatprep.subr.mxu0 0.0
          %1494 = vmatpush2.msra.mxu0 0.0
          %1495 = vmatprep.subr.mxu0 0.0
          %1496 = vmatpush2.msra.mxu0 0.0
          %1497 = vmatprep.subr.mxu0 0.0
          %1498 = vmatpush2.msra.mxu0 0.0
          %1499 = vmatprep.mubr.f32.mxu0 0.0
          %1500 = vmatmul.mubr.f32.gmra.mxu0 %v1433
          %v1501 = vpop.f32.mrf.mxu0
          %v1502 = vadd.f32 0.0, %v1501
          %v1503 = vpop.f32.mrf.mxu0
          %1504 = vdwg.mxu0
          %v1506 = vsel %vm744, %v1277, 0
          %1508 = vmatprep.subr.mxu0 0.0
          %1509 = vmatpush1.msra.mxu0 0.0
          %1510 = vmatprep.subr.mxu0 0.0
          %1511 = vmatpush1.msra.mxu0 0.0
          %1512 = vmatprep.subr.mxu0 0.0
          %1513 = vmatpush1.msra.mxu0 0.0
          %1514 = vmatprep.subr.mxu0 0.0
          %1515 = vmatpush1.msra.mxu0 0.0
          %1516 = vmatprep.subr.mxu0 0.0
          %1517 = vmatpush1.msra.mxu0 0.0
          %1518 = vmatprep.subr.mxu0 0.0
          %1519 = vmatpush1.msra.mxu0 0.0
          %1520 = vmatprep.subr.mxu0 0.0
          %1521 = vmatpush1.msra.mxu0 0.0
          %1522 = vmatprep.subr.mxu0 0.0
          %1523 = vmatpush1.msra.mxu0 0.0
          %1524 = vmatprep.subr.mxu0 0.0
          %1525 = vmatpush1.msra.mxu0 0.0
          %1526 = vmatprep.subr.mxu0 0.0
          %1527 = vmatpush1.msra.mxu0 0.0
          %1528 = vmatprep.subr.mxu0 0.0
          %1529 = vmatpush1.msra.mxu0 0.0
          %1530 = vmatprep.subr.mxu0 0.0
          %1531 = vmatpush1.msra.mxu0 0.0
          %1532 = vmatprep.subr.mxu0 0.0
          %1533 = vmatpush1.msra.mxu0 0.0
          %1534 = vmatprep.subr.mxu0 0.0
          %1535 = vmatpush1.msra.mxu0 0.0
          %1536 = vmatprep.subr.mxu0 0.0
          %1537 = vmatpush1.msra.mxu0 %v1285
          %1538 = vmatprep.subr.mxu0 0.0
          %1539 = vmatpush1.msra.mxu0 %v1284
          %1540 = vmatprep.subr.mxu0 0.0
          %1541 = vmatpush2.msra.mxu0 0.0
          %1542 = vmatprep.subr.mxu0 0.0
          %1543 = vmatpush2.msra.mxu0 0.0
          %1544 = vmatprep.subr.mxu0 0.0
          %1545 = vmatpush2.msra.mxu0 0.0
          %1546 = vmatprep.subr.mxu0 0.0
          %1547 = vmatpush2.msra.mxu0 0.0
          %1548 = vmatprep.subr.mxu0 0.0
          %1549 = vmatpush2.msra.mxu0 0.0
          %1550 = vmatprep.subr.mxu0 0.0
          %1551 = vmatpush2.msra.mxu0 0.0
          %1552 = vmatprep.subr.mxu0 0.0
          %1553 = vmatpush2.msra.mxu0 0.0
          %1554 = vmatprep.subr.mxu0 0.0
          %1555 = vmatpush2.msra.mxu0 0.0
          %1556 = vmatprep.subr.mxu0 0.0
          %1557 = vmatpush2.msra.mxu0 0.0
          %1558 = vmatprep.subr.mxu0 0.0
          %1559 = vmatpush2.msra.mxu0 0.0
          %1560 = vmatprep.subr.mxu0 0.0
          %1561 = vmatpush2.msra.mxu0 0.0
          %1562 = vmatprep.subr.mxu0 0.0
          %1563 = vmatpush2.msra.mxu0 0.0
          %1564 = vmatprep.subr.mxu0 0.0
          %1565 = vmatpush2.msra.mxu0 0.0
          %1566 = vmatprep.subr.mxu0 0.0
          %1567 = vmatpush2.msra.mxu0 0.0
          %1568 = vmatprep.subr.mxu0 0.0
          %1569 = vmatpush2.msra.mxu0 0.0
          %1570 = vmatprep.subr.mxu0 0.0
          %1571 = vmatpush2.msra.mxu0 0.0
          %1572 = vmatprep.mubr.f32.mxu0 0.0
          %1573 = vmatmul.mubr.f32.gmra.mxu0 %v1506
          %v1574 = vpop.f32.mrf.mxu0
          %v1575 = vadd.f32 0.0, %v1574
          %v1576 = vpop.f32.mrf.mxu0
          %1577 = vdwg.mxu0
          %v1578 = vld [vmem:[#allocation3] sm:$0x1]
          %v1579 = vld [vmem:[#allocation3 + $0x8] sm:$0x1]
          %v1580 = vld [vmem:[#allocation3 + $0x10] sm:$0x1]
          %v1581 = vld [vmem:[#allocation3 + $0x18] sm:$0x1]
          %v1582 = vlaneseq
          %v1583 = vshrl.u32 %v1582, 7
          %v1584 = vsub.s32 0, %v1583
          %v1585 = vrot.slane %v1578, %v1584
          %v1586 = vlaneseq
          %v1587 = vshrl.u32 %v1586, 7
          %v1588 = vsub.s32 0, %v1587
          %v1589 = vrot.slane %v1579, %v1588
          %v1590 = vlaneseq
          %v1591 = vshrl.u32 %v1590, 7
          %v1592 = vsub.s32 0, %v1591
          %v1593 = vrot.slane %v1580, %v1592
          %v1594 = vlaneseq
          %v1595 = vshrl.u32 %v1594, 7
          %v1596 = vsub.s32 0, %v1595
          %v1597 = vrot.slane %v1581, %v1596
          %v1598 = vmul.f32 %v1274, %v1585
          %v1599 = vmul.f32 %v1275, %v1589
          %v1600 = vmul.f32 %v1276, %v1593
          %v1601 = vmul.f32 %v1277, %v1597
          %v1602 = vsel %vm744, %v1598, 0.0
          %1603 = vadd.xlane.f32.xlu0 %v1602
          %v1604 = vpop.xlane.xlu0 %1603
          %v1605 = vsel %vm744, %v1599, 0.0
          %1606 = vadd.xlane.f32.xlu0 %v1605
          %v1607 = vpop.xlane.xlu0 %1606
          %v1608 = vsel %vm744, %v1600, 0.0
          %1609 = vadd.xlane.f32.xlu0 %v1608
          %v1610 = vpop.xlane.xlu0 %1609
          %v1611 = vsel %vm744, %v1601, 0.0
          %1612 = vadd.xlane.f32.xlu0 %v1611
          %v1613 = vpop.xlane.xlu0 %1612
          %v1614 = vmax.f32 %v1604, 1e-06
          %v1615 = vmax.f32 %v1607, 1e-06
          %v1616 = vmax.f32 %v1610, 1e-06
          %v1617 = vmax.f32 %v1613, 1e-06
          %v1618 = vrcp.pop %v1614
          %v1619 = vrcp.pop %v1615
          %v1620 = vrcp.pop %v1616
          %v1621 = vrcp.pop %v1617
          %v1622 = vmul.f32 %v1356, %v1618
          %v1623 = vmul.f32 %v1429, %v1619
          %v1624 = vmul.f32 %v1502, %v1620
          %v1625 = vmul.f32 %v1575, %v1621
          %1626 = vst.msk [vmem:[%s375] sm:$0xff] %vm448, %v1622
          %1627 = vst.msk [vmem:[%s375 + $0x8] sm:$0xff] %vm448, %v1623
          %1628 = vst.msk [vmem:[%s375 + $0x10] sm:$0xff] %vm448, %v1624
          %1629 = vst.msk [vmem:[%s375 + $0x18] sm:$0xff] %vm448, %v1625
        $region60: #{tpu_custom_call.1} parent=39 // pred_fallthru
          _
        %s1630 = sand.u32 %s190, 1
        %s1631 = scalar_lea.sflag [#allocation6], %s1630
        %s1632 = sand.u32 %s190, 1
        %s1633 = smul.addr %s1632, 32
        %s1634 = scalar_lea.vmem [#allocation10], %s1633
        // Predicated region
        $region61: #{tpu_custom_call.1} parent=39 // pred_check
          %p1635 = pneg %p200
        $region62: #{tpu_custom_call.1} parent=39 // pred_check_branch
          %1637 = sbr.rel (%p1635) target = $region64
        $region63: #{tpu_custom_call.1} parent=39 // pred_region
          %s1638 = smul.u32 4, %s30
          %s1640 = ssub.s32 512, 512
          %1641 = vsyncadd %s1631, %s1640
          %s1642 = sadd.s32 %s31, %s1638
          %s1643 = smul.addr %s1642, 128
          %s1644 = scalar_lea.hbm %s5, %s1643
          %s1645 = sshll.u32 %s1634, 4
          %s1646 = int_to_ptr.vmem [resolvable:$true] %s1645
          %1651 = dma.vmem_to_hbm [thread:$0]  %s1646, 512, %s1644, %s1631, 128, 128, 8
        $region64: #{tpu_custom_call.1} parent=39 // pred_fallthru
          _
      $region40: #{tpu_custom_call.1} parent=5 // pred_fallthru
        _
      %p1652 = scmp.le.s32.totalorder 2, %s20
      // Predicated region
      $region65: #{tpu_custom_call.1} parent=5 // pred_check
        %p1653 = pneg %p1652
      $region66: #{tpu_custom_call.1} parent=5 // pred_check_branch
        %1655 = sbr.rel (%p1653) target = $region68
      $region67: #{tpu_custom_call.1} parent=5 // pred_region
        %s1656 = ssub.s32 %s20, 2
        // Predicated region
        $region69: #{tpu_custom_call.1} parent=67 // pred_check
          %p1657 = pneg %p206
        $region70: #{tpu_custom_call.1} parent=67 // pred_check_branch
          %1659 = sbr.rel (%p1657) target = $region72
        $region71: #{tpu_custom_call.1} parent=67 // pred_region
          %s1660 = sand.u32 %s191, 1
          %s1661 = scalar_lea.sflag [#allocation6], %s1660
          %s1662 = sand.u32 %s191, 1
          %s1663 = smul.addr %s1662, 32
          %s1664 = scalar_lea.vmem [#allocation10], %s1663
          %1665 = dma.done %s1661, 512
        $region72: #{tpu_custom_call.1} parent=67 // pred_fallthru
          _
      $region68: #{tpu_custom_call.1} parent=5 // pred_fallthru
        _
    $region6: #{tpu_custom_call.1} parent=1 // loop_footer
      %s24 = sadd.s32 1, %s20
    $region7: #{tpu_custom_call.1} parent=1 // loop_footer_branch
      %19 = sbr.rel target = $region3
    $region8: #{tpu_custom_call.1} parent=1 // loop_exit
      _
    %1666 = vsyncpa [#allocation5], 1
    %s1667 = scalar_lea.sflag [#allocation5], 1
    %1668 = vsyncpa %s1667, 1
    %1669 = vsyncpa [#allocation8], 1
    %s1670 = scalar_lea.sflag [#allocation8], 1
    %1671 = vsyncpa %s1670, 1
    %1672 = vsyncpa [#allocation6], 1
    %s1673 = scalar_lea.sflag [#allocation6], 1
    %1674 = vsyncpa %s1673, 1

</llo_original>
